<compile_context>
chip_gen: v5e
topology: v5e:2x2
jax: 0.10.0
libtpu: 0.0.40
codegen_flags: <defaults>
</compile_context>

<pallas_src>
import functools

import jax
import jax.numpy as jnp
from jax.experimental import pallas as pl
from jax.experimental.pallas import tpu as pltpu

EPS = 1e-5
LRELU_OUTER = 0.01   # F.leaky_relu default
LRELU_ATT = 0.2      # GATConv attention leaky_relu default
MASK_NEG = 1e9       # additive mask magnitude (bf16-representable)

_VMEM = pl.BlockSpec(memory_space=pltpu.MemorySpace.VMEM)


def _leaky(x, slope):
    return jnp.where(x > 0, x, slope * x)


def _bn_normalize(v):
    # gamma/beta are folded into the following linear weights outside the kernel
    mu = jnp.mean(v, axis=0, keepdims=True)
    var = jnp.mean((v - mu) ** 2, axis=0, keepdims=True)
    return (v - mu) * jax.lax.rsqrt(var + EPS)


# ---------------------------------------------------------------------------
# Fused kernel: feat block + 3 GAT layers + global_add_pool
# ---------------------------------------------------------------------------
def fused_gat_kernel(x_ref, wf_ref, bf_ref, wl_ref, bl_ref, attl_ref, biasl_ref,
                     mask_ref, pool_ref, h_ref, g_ref, *, heads, cdim, num_layers):
    # --- bn_feat + conv_feat (gfn=True -> plain linear; gamma/beta folded) ---
    h = jnp.dot(_bn_normalize(x_ref[...]), wf_ref[...],
                preferred_element_type=jnp.float32) + bf_ref[...]
    h = _leaky(h, LRELU_OUTER)

    # additive attention mask: bf16 in HBM, converted once, resident all layers
    mask = mask_ref[...].astype(jnp.float32)                      # [N, N]

    for l in range(num_layers):                                   # static unroll
        # BN (normalize only) + folded linear -> per-head features
        xt = jnp.dot(_bn_normalize(h), wl_ref[l],
                     preferred_element_type=jnp.float32) + bl_ref[l]   # [N, hidden]

        # all heads' attention coefficients in a single MXU matmul:
        # columns [0:heads] = alpha_src per head, [heads:2*heads] = alpha_dst
        alpha = jnp.dot(xt, attl_ref[l],
                        preferred_element_type=jnp.float32)       # [N, 2*heads]
        a_dst = alpha[:, heads:]                                  # [N, heads]
        a_srcT = alpha[:, :heads].T                               # [heads, N] (one small XLU transpose / layer)

        xt_b = xt.astype(jnp.bfloat16)                            # bf16 MXU ingest
        bias_row = biasl_ref[l]                                   # [1, hidden]

        for hd in range(heads):                                   # static unroll
            # e[i, j] = leaky(a_dst[i] + a_src[j]) + additive mask
            e = _leaky(a_dst[:, hd:hd + 1] + a_srcT[hd:hd + 1, :], LRELU_ATT) + mask
            m = jnp.max(e, axis=1, keepdims=True)                 # [N, 1]
            p = jnp.exp(e - m)                                    # unnormalized numerator
            s = jnp.sum(p, axis=1, keepdims=True)                 # [N, 1]
            agg = jnp.dot(p.astype(jnp.bfloat16),
                          xt_b[:, hd * cdim:(hd + 1) * cdim],
                          preferred_element_type=jnp.float32)     # [N, cdim]
            # deferred softmax normalization on the EUP (free slot)
            col = agg * pl.reciprocal(s, approx=True)
            # write directly into the output ref column slice (no concat)
            h_ref[:, hd * cdim:(hd + 1) * cdim] = _leaky(
                col + bias_row[:, hd * cdim:(hd + 1) * cdim], LRELU_OUTER)

        h = h_ref[...]                                            # carry to next layer

    # global_add_pool: one-hot segment matmul (pool matrix stored bf16: exact 0/1)
    g_ref[...] = jnp.dot(pool_ref[...].astype(jnp.float32), h,
                         preferred_element_type=jnp.float32)


def run_fused(x, wf, bf, wl, bl, attl, biasl, mask_bias, pool_mat, *, heads, cdim,
              num_layers):
    n = x.shape[0]
    hidden = heads * cdim
    g = pool_mat.shape[0]
    kern = functools.partial(fused_gat_kernel, heads=heads, cdim=cdim,
                             num_layers=num_layers)
    return pl.pallas_call(
        kern,
        out_shape=(jax.ShapeDtypeStruct((n, hidden), jnp.float32),
                   jax.ShapeDtypeStruct((g, hidden), jnp.float32)),
        in_specs=[_VMEM] * 9,
        out_specs=(_VMEM, _VMEM),
        compiler_params=pltpu.CompilerParams(vmem_limit_bytes=32 * 1024 * 1024),
    )(x, wf, bf, wl, bl, attl, biasl, mask_bias, pool_mat)


# ---------------------------------------------------------------------------
# Parameter construction (deterministic, mirrors GAT.__init__ shapes)
# ---------------------------------------------------------------------------
def init_params(key, num_features, hidden, head, num_conv_layers):
    def glorot(k, shape):
        fan_in, fan_out = shape[-2], shape[-1]
        lim = jnp.sqrt(6.0 / (fan_in + fan_out))
        return jax.random.uniform(k, shape, jnp.float32, -lim, lim)

    cdim = hidden // head
    keys = jax.random.split(key, 1 + 3 * num_conv_layers)
    params = {
        "bn_feat_gamma": jnp.ones((1, num_features), jnp.float32),
        "bn_feat_beta": jnp.full((1, num_features), 1e-4, jnp.float32),
        "conv_feat_w": glorot(keys[0], (num_features, hidden)),   # gfn=True: linear only
        "layers": [],
    }
    for i in range(num_conv_layers):
        k_w, k_as, k_ad = keys[1 + 3 * i:4 + 3 * i]
        params["layers"].append({
            "bn_gamma": jnp.ones((1, hidden), jnp.float32),
            "bn_beta": jnp.full((1, hidden), 1e-4, jnp.float32),
            "w": glorot(k_w, (hidden, head * cdim)),
            "att_src": glorot(k_as, (head, cdim)),
            "att_dst": glorot(k_ad, (head, cdim)),
            "bias": jnp.zeros((1, head * cdim), jnp.float32),
        })
    return params


def gat_forward(x, edge_index, batch, params, *, head, num_graphs, reconstruct=0.0):
    n = x.shape[0]
    hidden = params["conv_feat_w"].shape[1]
    heads = head
    cdim = hidden // heads
    num_layers = len(params["layers"])

    # dense additive mask (bf16): 0 for edge src->dst (incl. self-loops), -1e9 else
    adj = jnp.zeros((n, n), jnp.float32)
    adj = adj.at[edge_index[1], edge_index[0]].set(1.0)
    adj = jnp.maximum(adj, jnp.eye(n, dtype=jnp.float32))
    mask_bias = ((adj - 1.0) * MASK_NEG).astype(jnp.bfloat16)

    # one-hot pooling matrix [G, N], stored bf16 (0/1 exact)
    pool_mat = (batch[None, :] == jnp.arange(num_graphs)[:, None]).astype(jnp.bfloat16)

    # fold BN affine params into the linear weights (outside the kernel)
    wf = params["bn_feat_gamma"].reshape(-1, 1) * params["conv_feat_w"]
    bf = params["bn_feat_beta"] @ params["conv_feat_w"]            # [1, hidden]

    wl, bl, attl, biasl = [], [], [], []
    for lp in params["layers"]:
        wl.append(lp["bn_gamma"].reshape(-1, 1) * lp["w"])
        bl.append(lp["bn_beta"] @ lp["w"])                         # [1, hidden]
        # block-diagonal attention projection [hidden, 2*heads]:
        # cols [0:heads] -> alpha_src, cols [heads:2*heads] -> alpha_dst
        a = jnp.zeros((hidden, 2 * heads), jnp.float32)
        for hd in range(heads):
            a = a.at[hd * cdim:(hd + 1) * cdim, hd].set(lp["att_src"][hd])
            a = a.at[hd * cdim:(hd + 1) * cdim, heads + hd].set(lp["att_dst"][hd])
        attl.append(a)
        biasl.append(lp["bias"])
    wl = jnp.stack(wl)        # [L, hidden, hidden]
    bl = jnp.stack(bl)        # [L, 1, hidden]
    attl = jnp.stack(attl)    # [L, hidden, 2*heads]
    biasl = jnp.stack(biasl)  # [L, 1, hidden]

    h, graph_emb = run_fused(x, wf, bf, wl, bl, attl, biasl, mask_bias, pool_mat,
                             heads=heads, cdim=cdim, num_layers=num_layers)
    if reconstruct == 0.0:
        return graph_emb
    return graph_emb, h


if __name__ == "__main__":
    # small, deterministic example
    NUM_FEATURES = 8
    HIDDEN = 32
    HEAD = 4
    NUM_LAYERS = 3
    NODES_PER_GRAPH = 8
    NUM_GRAPHS = 2
    N = NODES_PER_GRAPH * NUM_GRAPHS

    key = jax.random.PRNGKey(0)
    k_x, k_p = jax.random.split(key)

    x = jax.random.normal(k_x, (N, NUM_FEATURES), jnp.float32)

    # two ring graphs of 8 nodes each (directed both ways)
    srcs, dsts = [], []
    for g in range(NUM_GRAPHS):
        base = g * NODES_PER_GRAPH
        for i in range(NODES_PER_GRAPH):
            a = base + i
            b = base + (i + 1) % NODES_PER_GRAPH
            srcs += [a, b]
            dsts += [b, a]
    edge_index = jnp.array([srcs, dsts], dtype=jnp.int32)          # [2, E]
    batch = jnp.repeat(jnp.arange(NUM_GRAPHS, dtype=jnp.int32), NODES_PER_GRAPH)

    params = init_params(k_p, NUM_FEATURES, HIDDEN, HEAD, NUM_LAYERS)

    graph_emb, h_nodes = gat_forward(x, edge_index, batch, params,
                                     head=HEAD, num_graphs=NUM_GRAPHS,
                                     reconstruct=1.0)
    jax.block_until_ready((graph_emb, h_nodes))
    assert graph_emb.shape == (NUM_GRAPHS, HIDDEN)
    assert h_nodes.shape == (N, HIDDEN)
    assert bool(jnp.all(jnp.isfinite(graph_emb)))
    assert bool(jnp.all(jnp.isfinite(h_nodes)))
    print("KERNEL_OK")
</pallas_src>

<mosaic_0001>
module attributes {stable_mosaic.version = 11 : i64} {
  func.func @fused_gat_kernel(%arg0: memref<16x8xf32, #tpu.memory_space<vmem>>, %arg1: memref<8x32xf32, #tpu.memory_space<vmem>>, %arg2: memref<1x32xf32, #tpu.memory_space<vmem>>, %arg3: memref<3x32x32xf32, #tpu.memory_space<vmem>>, %arg4: memref<3x1x32xf32, #tpu.memory_space<vmem>>, %arg5: memref<3x32x8xf32, #tpu.memory_space<vmem>>, %arg6: memref<3x1x32xf32, #tpu.memory_space<vmem>>, %arg7: memref<16x16xbf16, #tpu.memory_space<vmem>>, %arg8: memref<2x16xbf16, #tpu.memory_space<vmem>>, %arg9: memref<16x32xf32, #tpu.memory_space<vmem>>, %arg10: memref<2x32xf32, #tpu.memory_space<vmem>>) attributes {dimension_semantics = [], scalar_prefetch = 0 : i64, scratch_operands = 0 : i64, tpu.core_type = #tpu.core_type<tc>} {
    %c0 = arith.constant 0 : index
    %c0_0 = arith.constant 0 : index
    %0 = vector.load %arg0[%c0, %c0_0] : memref<16x8xf32, #tpu.memory_space<vmem>>, vector<16x8xf32>
    %cst = arith.constant dense<0.000000e+00> : vector<8xf32>
    %1 = vector.multi_reduction <add>, %0, %cst [0] : vector<16x8xf32> to vector<8xf32>
    %2 = vector.shape_cast %1 : vector<8xf32> to vector<1x8xf32>
    %cst_1 = arith.constant 1.600000e+01 : f32
    %3 = vector.broadcast %cst_1 : f32 to vector<1x8xf32>
    %4 = arith.divf %2, %3 : vector<1x8xf32>
    %5 = vector.broadcast %4 : vector<1x8xf32> to vector<16x8xf32>
    %6 = arith.subf %0, %5 : vector<16x8xf32>
    %7 = arith.mulf %6, %6 : vector<16x8xf32>
    %cst_2 = arith.constant dense<0.000000e+00> : vector<8xf32>
    %8 = vector.multi_reduction <add>, %7, %cst_2 [0] : vector<16x8xf32> to vector<8xf32>
    %9 = vector.shape_cast %8 : vector<8xf32> to vector<1x8xf32>
    %cst_3 = arith.constant 1.600000e+01 : f32
    %10 = vector.broadcast %cst_3 : f32 to vector<1x8xf32>
    %11 = arith.divf %9, %10 : vector<1x8xf32>
    %12 = vector.broadcast %4 : vector<1x8xf32> to vector<16x8xf32>
    %13 = arith.subf %0, %12 : vector<16x8xf32>
    %cst_4 = arith.constant 9.99999974E-6 : f32
    %14 = vector.broadcast %cst_4 : f32 to vector<1x8xf32>
    %15 = arith.addf %11, %14 : vector<1x8xf32>
    %16 = math.rsqrt %15 : vector<1x8xf32>
    %17 = vector.broadcast %16 : vector<1x8xf32> to vector<16x8xf32>
    %18 = arith.mulf %13, %17 : vector<16x8xf32>
    %c0_5 = arith.constant 0 : index
    %c0_6 = arith.constant 0 : index
    %19 = vector.load %arg1[%c0_5, %c0_6] : memref<8x32xf32, #tpu.memory_space<vmem>>, vector<8x32xf32>
    %cst_7 = arith.constant dense<0.000000e+00> : vector<16x32xf32>
    %20 = tpu.matmul %18, %19, %cst_7 {dimension_numbers = #tpu.dot_dimension_numbers<[1], [0], [0], [1], [0, 0, 1, 1], [], []>} : vector<16x8xf32>, vector<8x32xf32>, vector<16x32xf32> -> vector<16x32xf32>
    %c0_8 = arith.constant 0 : index
    %c0_9 = arith.constant 0 : index
    %21 = vector.load %arg2[%c0_8, %c0_9] : memref<1x32xf32, #tpu.memory_space<vmem>>, vector<1x32xf32>
    %22 = vector.broadcast %21 : vector<1x32xf32> to vector<16x32xf32>
    %23 = arith.addf %20, %22 : vector<16x32xf32>
    %cst_10 = arith.constant 0.000000e+00 : f32
    %24 = vector.broadcast %cst_10 : f32 to vector<16x32xf32>
    %25 = arith.cmpf ogt, %23, %24 : vector<16x32xf32>
    %cst_11 = arith.constant 0.00999999977 : f32
    %26 = vector.broadcast %cst_11 : f32 to vector<16x32xf32>
    %27 = arith.mulf %26, %23 : vector<16x32xf32>
    %28 = arith.select %25, %23, %27 : vector<16x32xi1>, vector<16x32xf32>
    %c0_12 = arith.constant 0 : index
    %c0_13 = arith.constant 0 : index
    %29 = vector.load %arg7[%c0_12, %c0_13] : memref<16x16xbf16, #tpu.memory_space<vmem>>, vector<16x16xbf16>
    %30 = arith.extf %29 : vector<16x16xbf16> to vector<16x16xf32>
    %cst_14 = arith.constant dense<0.000000e+00> : vector<32xf32>
    %31 = vector.multi_reduction <add>, %28, %cst_14 [0] : vector<16x32xf32> to vector<32xf32>
    %32 = vector.shape_cast %31 : vector<32xf32> to vector<1x32xf32>
    %cst_15 = arith.constant 1.600000e+01 : f32
    %33 = vector.broadcast %cst_15 : f32 to vector<1x32xf32>
    %34 = arith.divf %32, %33 : vector<1x32xf32>
    %35 = vector.broadcast %34 : vector<1x32xf32> to vector<16x32xf32>
    %36 = arith.subf %28, %35 : vector<16x32xf32>
    %37 = arith.mulf %36, %36 : vector<16x32xf32>
    %cst_16 = arith.constant dense<0.000000e+00> : vector<32xf32>
    %38 = vector.multi_reduction <add>, %37, %cst_16 [0] : vector<16x32xf32> to vector<32xf32>
    %39 = vector.shape_cast %38 : vector<32xf32> to vector<1x32xf32>
    %cst_17 = arith.constant 1.600000e+01 : f32
    %40 = vector.broadcast %cst_17 : f32 to vector<1x32xf32>
    %41 = arith.divf %39, %40 : vector<1x32xf32>
    %42 = vector.broadcast %34 : vector<1x32xf32> to vector<16x32xf32>
    %43 = arith.subf %28, %42 : vector<16x32xf32>
    %cst_18 = arith.constant 9.99999974E-6 : f32
    %44 = vector.broadcast %cst_18 : f32 to vector<1x32xf32>
    %45 = arith.addf %41, %44 : vector<1x32xf32>
    %46 = math.rsqrt %45 : vector<1x32xf32>
    %47 = vector.broadcast %46 : vector<1x32xf32> to vector<16x32xf32>
    %48 = arith.mulf %43, %47 : vector<16x32xf32>
    %c0_19 = arith.constant 0 : index
    %c0_20 = arith.constant 0 : index
    %c0_21 = arith.constant 0 : index
    %49 = vector.load %arg3[%c0_19, %c0_20, %c0_21] : memref<3x32x32xf32, #tpu.memory_space<vmem>>, vector<1x32x32xf32>
    %50 = vector.shape_cast %49 : vector<1x32x32xf32> to vector<32x32xf32>
    %cst_22 = arith.constant dense<0.000000e+00> : vector<16x32xf32>
    %51 = tpu.matmul %48, %50, %cst_22 {dimension_numbers = #tpu.dot_dimension_numbers<[1], [0], [0], [1], [0, 0, 1, 1], [], []>} : vector<16x32xf32>, vector<32x32xf32>, vector<16x32xf32> -> vector<16x32xf32>
    %c0_23 = arith.constant 0 : index
    %c0_24 = arith.constant 0 : index
    %c0_25 = arith.constant 0 : index
    %52 = vector.load %arg4[%c0_23, %c0_24, %c0_25] : memref<3x1x32xf32, #tpu.memory_space<vmem>>, vector<1x1x32xf32>
    %53 = vector.shape_cast %52 : vector<1x1x32xf32> to vector<1x32xf32>
    %54 = vector.broadcast %53 : vector<1x32xf32> to vector<16x32xf32>
    %55 = arith.addf %51, %54 : vector<16x32xf32>
    %c0_26 = arith.constant 0 : index
    %c0_27 = arith.constant 0 : index
    %c0_28 = arith.constant 0 : index
    %56 = vector.load %arg5[%c0_26, %c0_27, %c0_28] : memref<3x32x8xf32, #tpu.memory_space<vmem>>, vector<1x32x8xf32>
    %57 = vector.shape_cast %56 : vector<1x32x8xf32> to vector<32x8xf32>
    %cst_29 = arith.constant dense<0.000000e+00> : vector<16x8xf32>
    %58 = tpu.matmul %55, %57, %cst_29 {dimension_numbers = #tpu.dot_dimension_numbers<[1], [0], [0], [1], [0, 0, 1, 1], [], []>} : vector<16x32xf32>, vector<32x8xf32>, vector<16x8xf32> -> vector<16x8xf32>
    %59 = vector.extract_strided_slice %58 {offsets = [0, 4], sizes = [16, 4], strides = [1, 1]} : vector<16x8xf32> to vector<16x4xf32>
    %60 = vector.extract_strided_slice %58 {offsets = [0, 0], sizes = [16, 4], strides = [1, 1]} : vector<16x8xf32> to vector<16x4xf32>
    %61 = tpu.transpose %60, [1, 0] : vector<16x4xf32> -> vector<4x16xf32>
    %62 = arith.truncf %55 : vector<16x32xf32> to vector<16x32xbf16>
    %c0_30 = arith.constant 0 : index
    %c0_31 = arith.constant 0 : index
    %c0_32 = arith.constant 0 : index
    %63 = vector.load %arg6[%c0_30, %c0_31, %c0_32] : memref<3x1x32xf32, #tpu.memory_space<vmem>>, vector<1x1x32xf32>
    %64 = vector.shape_cast %63 : vector<1x1x32xf32> to vector<1x32xf32>
    %65 = vector.extract_strided_slice %59 {offsets = [0, 0], sizes = [16, 1], strides = [1, 1]} : vector<16x4xf32> to vector<16x1xf32>
    %66 = vector.extract_strided_slice %61 {offsets = [0, 0], sizes = [1, 16], strides = [1, 1]} : vector<4x16xf32> to vector<1x16xf32>
    %67 = vector.broadcast %65 : vector<16x1xf32> to vector<16x16xf32>
    %68 = vector.broadcast %66 : vector<1x16xf32> to vector<16x16xf32>
    %69 = arith.addf %67, %68 : vector<16x16xf32>
    %cst_33 = arith.constant 0.000000e+00 : f32
    %70 = vector.broadcast %cst_33 : f32 to vector<16x16xf32>
    %71 = arith.cmpf ogt, %69, %70 : vector<16x16xf32>
    %cst_34 = arith.constant 2.000000e-01 : f32
    %72 = vector.broadcast %cst_34 : f32 to vector<16x16xf32>
    %73 = arith.mulf %72, %69 : vector<16x16xf32>
    %74 = arith.select %71, %69, %73 : vector<16x16xi1>, vector<16x16xf32>
    %75 = arith.addf %74, %30 : vector<16x16xf32>
    %cst_35 = arith.constant dense<0xFF800000> : vector<16xf32>
    %76 = vector.multi_reduction <maximumf>, %75, %cst_35 [1] : vector<16x16xf32> to vector<16xf32>
    %77 = vector.shape_cast %76 : vector<16xf32> to vector<16x1xf32>
    %78 = vector.broadcast %77 : vector<16x1xf32> to vector<16x16xf32>
    %79 = arith.subf %75, %78 : vector<16x16xf32>
    %80 = math.exp %79 : vector<16x16xf32>
    %cst_36 = arith.constant dense<0.000000e+00> : vector<16xf32>
    %81 = vector.multi_reduction <add>, %80, %cst_36 [1] : vector<16x16xf32> to vector<16xf32>
    %82 = vector.shape_cast %81 : vector<16xf32> to vector<16x1xf32>
    %83 = arith.truncf %80 : vector<16x16xf32> to vector<16x16xbf16>
    %84 = vector.extract_strided_slice %62 {offsets = [0, 0], sizes = [16, 8], strides = [1, 1]} : vector<16x32xbf16> to vector<16x8xbf16>
    %cst_37 = arith.constant dense<0.000000e+00> : vector<16x8xf32>
    %85 = tpu.matmul %83, %84, %cst_37 {dimension_numbers = #tpu.dot_dimension_numbers<[1], [0], [0], [1], [0, 0, 1, 1], [], []>} : vector<16x16xbf16>, vector<16x8xbf16>, vector<16x8xf32> -> vector<16x8xf32>
    %86 = tpu.reciprocal %82 {approx = true} : vector<16x1xf32> -> vector<16x1xf32>
    %87 = vector.broadcast %86 : vector<16x1xf32> to vector<16x8xf32>
    %88 = arith.mulf %85, %87 : vector<16x8xf32>
    %89 = vector.extract_strided_slice %64 {offsets = [0, 0], sizes = [1, 8], strides = [1, 1]} : vector<1x32xf32> to vector<1x8xf32>
    %90 = vector.broadcast %89 : vector<1x8xf32> to vector<16x8xf32>
    %91 = arith.addf %88, %90 : vector<16x8xf32>
    %cst_38 = arith.constant 0.000000e+00 : f32
    %92 = vector.broadcast %cst_38 : f32 to vector<16x8xf32>
    %93 = arith.cmpf ogt, %91, %92 : vector<16x8xf32>
    %cst_39 = arith.constant 0.00999999977 : f32
    %94 = vector.broadcast %cst_39 : f32 to vector<16x8xf32>
    %95 = arith.mulf %94, %91 : vector<16x8xf32>
    %96 = arith.select %93, %91, %95 : vector<16x8xi1>, vector<16x8xf32>
    %c0_40 = arith.constant 0 : index
    %c0_41 = arith.constant 0 : index
    %97 = vector.load %arg9[%c0_40, %c0_41] : memref<16x32xf32, #tpu.memory_space<vmem>>, vector<16x8xf32>
    tpu.vector_store %arg9[%c0_40, %c0_41], %96 {strides = array<i32>} : memref<16x32xf32, #tpu.memory_space<vmem>>, vector<16x8xf32>,
    %98 = vector.extract_strided_slice %59 {offsets = [0, 1], sizes = [16, 1], strides = [1, 1]} : vector<16x4xf32> to vector<16x1xf32>
    %99 = vector.extract_strided_slice %61 {offsets = [1, 0], sizes = [1, 16], strides = [1, 1]} : vector<4x16xf32> to vector<1x16xf32>
    %100 = vector.broadcast %98 : vector<16x1xf32> to vector<16x16xf32>
    %101 = vector.broadcast %99 : vector<1x16xf32> to vector<16x16xf32>
    %102 = arith.addf %100, %101 : vector<16x16xf32>
    %cst_42 = arith.constant 0.000000e+00 : f32
    %103 = vector.broadcast %cst_42 : f32 to vector<16x16xf32>
    %104 = arith.cmpf ogt, %102, %103 : vector<16x16xf32>
    %cst_43 = arith.constant 2.000000e-01 : f32
    %105 = vector.broadcast %cst_43 : f32 to vector<16x16xf32>
    %106 = arith.mulf %105, %102 : vector<16x16xf32>
    %107 = arith.select %104, %102, %106 : vector<16x16xi1>, vector<16x16xf32>
    %108 = arith.addf %107, %30 : vector<16x16xf32>
    %cst_44 = arith.constant dense<0xFF800000> : vector<16xf32>
    %109 = vector.multi_reduction <maximumf>, %108, %cst_44 [1] : vector<16x16xf32> to vector<16xf32>
    %110 = vector.shape_cast %109 : vector<16xf32> to vector<16x1xf32>
    %111 = vector.broadcast %110 : vector<16x1xf32> to vector<16x16xf32>
    %112 = arith.subf %108, %111 : vector<16x16xf32>
    %113 = math.exp %112 : vector<16x16xf32>
    %cst_45 = arith.constant dense<0.000000e+00> : vector<16xf32>
    %114 = vector.multi_reduction <add>, %113, %cst_45 [1] : vector<16x16xf32> to vector<16xf32>
    %115 = vector.shape_cast %114 : vector<16xf32> to vector<16x1xf32>
    %116 = arith.truncf %113 : vector<16x16xf32> to vector<16x16xbf16>
    %117 = vector.extract_strided_slice %62 {offsets = [0, 8], sizes = [16, 8], strides = [1, 1]} : vector<16x32xbf16> to vector<16x8xbf16>
    %cst_46 = arith.constant dense<0.000000e+00> : vector<16x8xf32>
    %118 = tpu.matmul %116, %117, %cst_46 {dimension_numbers = #tpu.dot_dimension_numbers<[1], [0], [0], [1], [0, 0, 1, 1], [], []>} : vector<16x16xbf16>, vector<16x8xbf16>, vector<16x8xf32> -> vector<16x8xf32>
    %119 = tpu.reciprocal %115 {approx = true} : vector<16x1xf32> -> vector<16x1xf32>
    %120 = vector.broadcast %119 : vector<16x1xf32> to vector<16x8xf32>
    %121 = arith.mulf %118, %120 : vector<16x8xf32>
    %122 = vector.extract_strided_slice %64 {offsets = [0, 8], sizes = [1, 8], strides = [1, 1]} : vector<1x32xf32> to vector<1x8xf32>
    %123 = vector.broadcast %122 : vector<1x8xf32> to vector<16x8xf32>
    %124 = arith.addf %121, %123 : vector<16x8xf32>
    %cst_47 = arith.constant 0.000000e+00 : f32
    %125 = vector.broadcast %cst_47 : f32 to vector<16x8xf32>
    %126 = arith.cmpf ogt, %124, %125 : vector<16x8xf32>
    %cst_48 = arith.constant 0.00999999977 : f32
    %127 = vector.broadcast %cst_48 : f32 to vector<16x8xf32>
    %128 = arith.mulf %127, %124 : vector<16x8xf32>
    %129 = arith.select %126, %124, %128 : vector<16x8xi1>, vector<16x8xf32>
    %c0_49 = arith.constant 0 : index
    %c8 = arith.constant 8 : index
    %130 = vector.load %arg9[%c0_49, %c8] : memref<16x32xf32, #tpu.memory_space<vmem>>, vector<16x8xf32>
    tpu.vector_store %arg9[%c0_49, %c8], %129 {strides = array<i32>} : memref<16x32xf32, #tpu.memory_space<vmem>>, vector<16x8xf32>,
    %131 = vector.extract_strided_slice %59 {offsets = [0, 2], sizes = [16, 1], strides = [1, 1]} : vector<16x4xf32> to vector<16x1xf32>
    %132 = vector.extract_strided_slice %61 {offsets = [2, 0], sizes = [1, 16], strides = [1, 1]} : vector<4x16xf32> to vector<1x16xf32>
    %133 = vector.broadcast %131 : vector<16x1xf32> to vector<16x16xf32>
    %134 = vector.broadcast %132 : vector<1x16xf32> to vector<16x16xf32>
    %135 = arith.addf %133, %134 : vector<16x16xf32>
    %cst_50 = arith.constant 0.000000e+00 : f32
    %136 = vector.broadcast %cst_50 : f32 to vector<16x16xf32>
    %137 = arith.cmpf ogt, %135, %136 : vector<16x16xf32>
    %cst_51 = arith.constant 2.000000e-01 : f32
    %138 = vector.broadcast %cst_51 : f32 to vector<16x16xf32>
    %139 = arith.mulf %138, %135 : vector<16x16xf32>
    %140 = arith.select %137, %135, %139 : vector<16x16xi1>, vector<16x16xf32>
    %141 = arith.addf %140, %30 : vector<16x16xf32>
    %cst_52 = arith.constant dense<0xFF800000> : vector<16xf32>
    %142 = vector.multi_reduction <maximumf>, %141, %cst_52 [1] : vector<16x16xf32> to vector<16xf32>
    %143 = vector.shape_cast %142 : vector<16xf32> to vector<16x1xf32>
    %144 = vector.broadcast %143 : vector<16x1xf32> to vector<16x16xf32>
    %145 = arith.subf %141, %144 : vector<16x16xf32>
    %146 = math.exp %145 : vector<16x16xf32>
    %cst_53 = arith.constant dense<0.000000e+00> : vector<16xf32>
    %147 = vector.multi_reduction <add>, %146, %cst_53 [1] : vector<16x16xf32> to vector<16xf32>
    %148 = vector.shape_cast %147 : vector<16xf32> to vector<16x1xf32>
    %149 = arith.truncf %146 : vector<16x16xf32> to vector<16x16xbf16>
    %150 = vector.extract_strided_slice %62 {offsets = [0, 16], sizes = [16, 8], strides = [1, 1]} : vector<16x32xbf16> to vector<16x8xbf16>
    %cst_54 = arith.constant dense<0.000000e+00> : vector<16x8xf32>
    %151 = tpu.matmul %149, %150, %cst_54 {dimension_numbers = #tpu.dot_dimension_numbers<[1], [0], [0], [1], [0, 0, 1, 1], [], []>} : vector<16x16xbf16>, vector<16x8xbf16>, vector<16x8xf32> -> vector<16x8xf32>
    %152 = tpu.reciprocal %148 {approx = true} : vector<16x1xf32> -> vector<16x1xf32>
    %153 = vector.broadcast %152 : vector<16x1xf32> to vector<16x8xf32>
    %154 = arith.mulf %151, %153 : vector<16x8xf32>
    %155 = vector.extract_strided_slice %64 {offsets = [0, 16], sizes = [1, 8], strides = [1, 1]} : vector<1x32xf32> to vector<1x8xf32>
    %156 = vector.broadcast %155 : vector<1x8xf32> to vector<16x8xf32>
    %157 = arith.addf %154, %156 : vector<16x8xf32>
    %cst_55 = arith.constant 0.000000e+00 : f32
    %158 = vector.broadcast %cst_55 : f32 to vector<16x8xf32>
    %159 = arith.cmpf ogt, %157, %158 : vector<16x8xf32>
    %cst_56 = arith.constant 0.00999999977 : f32
    %160 = vector.broadcast %cst_56 : f32 to vector<16x8xf32>
    %161 = arith.mulf %160, %157 : vector<16x8xf32>
    %162 = arith.select %159, %157, %161 : vector<16x8xi1>, vector<16x8xf32>
    %c0_57 = arith.constant 0 : index
    %c16 = arith.constant 16 : index
    %163 = vector.load %arg9[%c0_57, %c16] : memref<16x32xf32, #tpu.memory_space<vmem>>, vector<16x8xf32>
    tpu.vector_store %arg9[%c0_57, %c16], %162 {strides = array<i32>} : memref<16x32xf32, #tpu.memory_space<vmem>>, vector<16x8xf32>,
    %164 = vector.extract_strided_slice %59 {offsets = [0, 3], sizes = [16, 1], strides = [1, 1]} : vector<16x4xf32> to vector<16x1xf32>
    %165 = vector.extract_strided_slice %61 {offsets = [3, 0], sizes = [1, 16], strides = [1, 1]} : vector<4x16xf32> to vector<1x16xf32>
    %166 = vector.broadcast %164 : vector<16x1xf32> to vector<16x16xf32>
    %167 = vector.broadcast %165 : vector<1x16xf32> to vector<16x16xf32>
    %168 = arith.addf %166, %167 : vector<16x16xf32>
    %cst_58 = arith.constant 0.000000e+00 : f32
    %169 = vector.broadcast %cst_58 : f32 to vector<16x16xf32>
    %170 = arith.cmpf ogt, %168, %169 : vector<16x16xf32>
    %cst_59 = arith.constant 2.000000e-01 : f32
    %171 = vector.broadcast %cst_59 : f32 to vector<16x16xf32>
    %172 = arith.mulf %171, %168 : vector<16x16xf32>
    %173 = arith.select %170, %168, %172 : vector<16x16xi1>, vector<16x16xf32>
    %174 = arith.addf %173, %30 : vector<16x16xf32>
    %cst_60 = arith.constant dense<0xFF800000> : vector<16xf32>
    %175 = vector.multi_reduction <maximumf>, %174, %cst_60 [1] : vector<16x16xf32> to vector<16xf32>
    %176 = vector.shape_cast %175 : vector<16xf32> to vector<16x1xf32>
    %177 = vector.broadcast %176 : vector<16x1xf32> to vector<16x16xf32>
    %178 = arith.subf %174, %177 : vector<16x16xf32>
    %179 = math.exp %178 : vector<16x16xf32>
    %cst_61 = arith.constant dense<0.000000e+00> : vector<16xf32>
    %180 = vector.multi_reduction <add>, %179, %cst_61 [1] : vector<16x16xf32> to vector<16xf32>
    %181 = vector.shape_cast %180 : vector<16xf32> to vector<16x1xf32>
    %182 = arith.truncf %179 : vector<16x16xf32> to vector<16x16xbf16>
    %183 = vector.extract_strided_slice %62 {offsets = [0, 24], sizes = [16, 8], strides = [1, 1]} : vector<16x32xbf16> to vector<16x8xbf16>
    %cst_62 = arith.constant dense<0.000000e+00> : vector<16x8xf32>
    %184 = tpu.matmul %182, %183, %cst_62 {dimension_numbers = #tpu.dot_dimension_numbers<[1], [0], [0], [1], [0, 0, 1, 1], [], []>} : vector<16x16xbf16>, vector<16x8xbf16>, vector<16x8xf32> -> vector<16x8xf32>
    %185 = tpu.reciprocal %181 {approx = true} : vector<16x1xf32> -> vector<16x1xf32>
    %186 = vector.broadcast %185 : vector<16x1xf32> to vector<16x8xf32>
    %187 = arith.mulf %184, %186 : vector<16x8xf32>
    %188 = vector.extract_strided_slice %64 {offsets = [0, 24], sizes = [1, 8], strides = [1, 1]} : vector<1x32xf32> to vector<1x8xf32>
    %189 = vector.broadcast %188 : vector<1x8xf32> to vector<16x8xf32>
    %190 = arith.addf %187, %189 : vector<16x8xf32>
    %cst_63 = arith.constant 0.000000e+00 : f32
    %191 = vector.broadcast %cst_63 : f32 to vector<16x8xf32>
    %192 = arith.cmpf ogt, %190, %191 : vector<16x8xf32>
    %cst_64 = arith.constant 0.00999999977 : f32
    %193 = vector.broadcast %cst_64 : f32 to vector<16x8xf32>
    %194 = arith.mulf %193, %190 : vector<16x8xf32>
    %195 = arith.select %192, %190, %194 : vector<16x8xi1>, vector<16x8xf32>
    %c0_65 = arith.constant 0 : index
    %c24 = arith.constant 24 : index
    %196 = vector.load %arg9[%c0_65, %c24] : memref<16x32xf32, #tpu.memory_space<vmem>>, vector<16x8xf32>
    tpu.vector_store %arg9[%c0_65, %c24], %195 {strides = array<i32>} : memref<16x32xf32, #tpu.memory_space<vmem>>, vector<16x8xf32>,
    %c0_66 = arith.constant 0 : index
    %c0_67 = arith.constant 0 : index
    %197 = vector.load %arg9[%c0_66, %c0_67] : memref<16x32xf32, #tpu.memory_space<vmem>>, vector<16x32xf32>
    %cst_68 = arith.constant dense<0.000000e+00> : vector<32xf32>
    %198 = vector.multi_reduction <add>, %197, %cst_68 [0] : vector<16x32xf32> to vector<32xf32>
    %199 = vector.shape_cast %198 : vector<32xf32> to vector<1x32xf32>
    %cst_69 = arith.constant 1.600000e+01 : f32
    %200 = vector.broadcast %cst_69 : f32 to vector<1x32xf32>
    %201 = arith.divf %199, %200 : vector<1x32xf32>
    %202 = vector.broadcast %201 : vector<1x32xf32> to vector<16x32xf32>
    %203 = arith.subf %197, %202 : vector<16x32xf32>
    %204 = arith.mulf %203, %203 : vector<16x32xf32>
    %cst_70 = arith.constant dense<0.000000e+00> : vector<32xf32>
    %205 = vector.multi_reduction <add>, %204, %cst_70 [0] : vector<16x32xf32> to vector<32xf32>
    %206 = vector.shape_cast %205 : vector<32xf32> to vector<1x32xf32>
    %cst_71 = arith.constant 1.600000e+01 : f32
    %207 = vector.broadcast %cst_71 : f32 to vector<1x32xf32>
    %208 = arith.divf %206, %207 : vector<1x32xf32>
    %209 = vector.broadcast %201 : vector<1x32xf32> to vector<16x32xf32>
    %210 = arith.subf %197, %209 : vector<16x32xf32>
    %cst_72 = arith.constant 9.99999974E-6 : f32
    %211 = vector.broadcast %cst_72 : f32 to vector<1x32xf32>
    %212 = arith.addf %208, %211 : vector<1x32xf32>
    %213 = math.rsqrt %212 : vector<1x32xf32>
    %214 = vector.broadcast %213 : vector<1x32xf32> to vector<16x32xf32>
    %215 = arith.mulf %210, %214 : vector<16x32xf32>
    %c1 = arith.constant 1 : index
    %c0_73 = arith.constant 0 : index
    %c0_74 = arith.constant 0 : index
    %216 = vector.load %arg3[%c1, %c0_73, %c0_74] : memref<3x32x32xf32, #tpu.memory_space<vmem>>, vector<1x32x32xf32>
    %217 = vector.shape_cast %216 : vector<1x32x32xf32> to vector<32x32xf32>
    %cst_75 = arith.constant dense<0.000000e+00> : vector<16x32xf32>
    %218 = tpu.matmul %215, %217, %cst_75 {dimension_numbers = #tpu.dot_dimension_numbers<[1], [0], [0], [1], [0, 0, 1, 1], [], []>} : vector<16x32xf32>, vector<32x32xf32>, vector<16x32xf32> -> vector<16x32xf32>
    %c1_76 = arith.constant 1 : index
    %c0_77 = arith.constant 0 : index
    %c0_78 = arith.constant 0 : index
    %219 = vector.load %arg4[%c1_76, %c0_77, %c0_78] : memref<3x1x32xf32, #tpu.memory_space<vmem>>, vector<1x1x32xf32>
    %220 = vector.shape_cast %219 : vector<1x1x32xf32> to vector<1x32xf32>
    %221 = vector.broadcast %220 : vector<1x32xf32> to vector<16x32xf32>
    %222 = arith.addf %218, %221 : vector<16x32xf32>
    %c1_79 = arith.constant 1 : index
    %c0_80 = arith.constant 0 : index
    %c0_81 = arith.constant 0 : index
    %223 = vector.load %arg5[%c1_79, %c0_80, %c0_81] : memref<3x32x8xf32, #tpu.memory_space<vmem>>, vector<1x32x8xf32>
    %224 = vector.shape_cast %223 : vector<1x32x8xf32> to vector<32x8xf32>
    %cst_82 = arith.constant dense<0.000000e+00> : vector<16x8xf32>
    %225 = tpu.matmul %222, %224, %cst_82 {dimension_numbers = #tpu.dot_dimension_numbers<[1], [0], [0], [1], [0, 0, 1, 1], [], []>} : vector<16x32xf32>, vector<32x8xf32>, vector<16x8xf32> -> vector<16x8xf32>
    %226 = vector.extract_strided_slice %225 {offsets = [0, 4], sizes = [16, 4], strides = [1, 1]} : vector<16x8xf32> to vector<16x4xf32>
    %227 = vector.extract_strided_slice %225 {offsets = [0, 0], sizes = [16, 4], strides = [1, 1]} : vector<16x8xf32> to vector<16x4xf32>
    %228 = tpu.transpose %227, [1, 0] : vector<16x4xf32> -> vector<4x16xf32>
    %229 = arith.truncf %222 : vector<16x32xf32> to vector<16x32xbf16>
    %c1_83 = arith.constant 1 : index
    %c0_84 = arith.constant 0 : index
    %c0_85 = arith.constant 0 : index
    %230 = vector.load %arg6[%c1_83, %c0_84, %c0_85] : memref<3x1x32xf32, #tpu.memory_space<vmem>>, vector<1x1x32xf32>
    %231 = vector.shape_cast %230 : vector<1x1x32xf32> to vector<1x32xf32>
    %232 = vector.extract_strided_slice %226 {offsets = [0, 0], sizes = [16, 1], strides = [1, 1]} : vector<16x4xf32> to vector<16x1xf32>
    %233 = vector.extract_strided_slice %228 {offsets = [0, 0], sizes = [1, 16], strides = [1, 1]} : vector<4x16xf32> to vector<1x16xf32>
    %234 = vector.broadcast %232 : vector<16x1xf32> to vector<16x16xf32>
    %235 = vector.broadcast %233 : vector<1x16xf32> to vector<16x16xf32>
    %236 = arith.addf %234, %235 : vector<16x16xf32>
    %cst_86 = arith.constant 0.000000e+00 : f32
    %237 = vector.broadcast %cst_86 : f32 to vector<16x16xf32>
    %238 = arith.cmpf ogt, %236, %237 : vector<16x16xf32>
    %cst_87 = arith.constant 2.000000e-01 : f32
    %239 = vector.broadcast %cst_87 : f32 to vector<16x16xf32>
    %240 = arith.mulf %239, %236 : vector<16x16xf32>
    %241 = arith.select %238, %236, %240 : vector<16x16xi1>, vector<16x16xf32>
    %242 = arith.addf %241, %30 : vector<16x16xf32>
    %cst_88 = arith.constant dense<0xFF800000> : vector<16xf32>
    %243 = vector.multi_reduction <maximumf>, %242, %cst_88 [1] : vector<16x16xf32> to vector<16xf32>
    %244 = vector.shape_cast %243 : vector<16xf32> to vector<16x1xf32>
    %245 = vector.broadcast %244 : vector<16x1xf32> to vector<16x16xf32>
    %246 = arith.subf %242, %245 : vector<16x16xf32>
    %247 = math.exp %246 : vector<16x16xf32>
    %cst_89 = arith.constant dense<0.000000e+00> : vector<16xf32>
    %248 = vector.multi_reduction <add>, %247, %cst_89 [1] : vector<16x16xf32> to vector<16xf32>
    %249 = vector.shape_cast %248 : vector<16xf32> to vector<16x1xf32>
    %250 = arith.truncf %247 : vector<16x16xf32> to vector<16x16xbf16>
    %251 = vector.extract_strided_slice %229 {offsets = [0, 0], sizes = [16, 8], strides = [1, 1]} : vector<16x32xbf16> to vector<16x8xbf16>
    %cst_90 = arith.constant dense<0.000000e+00> : vector<16x8xf32>
    %252 = tpu.matmul %250, %251, %cst_90 {dimension_numbers = #tpu.dot_dimension_numbers<[1], [0], [0], [1], [0, 0, 1, 1], [], []>} : vector<16x16xbf16>, vector<16x8xbf16>, vector<16x8xf32> -> vector<16x8xf32>
    %253 = tpu.reciprocal %249 {approx = true} : vector<16x1xf32> -> vector<16x1xf32>
    %254 = vector.broadcast %253 : vector<16x1xf32> to vector<16x8xf32>
    %255 = arith.mulf %252, %254 : vector<16x8xf32>
    %256 = vector.extract_strided_slice %231 {offsets = [0, 0], sizes = [1, 8], strides = [1, 1]} : vector<1x32xf32> to vector<1x8xf32>
    %257 = vector.broadcast %256 : vector<1x8xf32> to vector<16x8xf32>
    %258 = arith.addf %255, %257 : vector<16x8xf32>
    %cst_91 = arith.constant 0.000000e+00 : f32
    %259 = vector.broadcast %cst_91 : f32 to vector<16x8xf32>
    %260 = arith.cmpf ogt, %258, %259 : vector<16x8xf32>
    %cst_92 = arith.constant 0.00999999977 : f32
    %261 = vector.broadcast %cst_92 : f32 to vector<16x8xf32>
    %262 = arith.mulf %261, %258 : vector<16x8xf32>
    %263 = arith.select %260, %258, %262 : vector<16x8xi1>, vector<16x8xf32>
    %c0_93 = arith.constant 0 : index
    %c0_94 = arith.constant 0 : index
    %264 = vector.load %arg9[%c0_93, %c0_94] : memref<16x32xf32, #tpu.memory_space<vmem>>, vector<16x8xf32>
    tpu.vector_store %arg9[%c0_93, %c0_94], %263 {strides = array<i32>} : memref<16x32xf32, #tpu.memory_space<vmem>>, vector<16x8xf32>,
    %265 = vector.extract_strided_slice %226 {offsets = [0, 1], sizes = [16, 1], strides = [1, 1]} : vector<16x4xf32> to vector<16x1xf32>
    %266 = vector.extract_strided_slice %228 {offsets = [1, 0], sizes = [1, 16], strides = [1, 1]} : vector<4x16xf32> to vector<1x16xf32>
    %267 = vector.broadcast %265 : vector<16x1xf32> to vector<16x16xf32>
    %268 = vector.broadcast %266 : vector<1x16xf32> to vector<16x16xf32>
    %269 = arith.addf %267, %268 : vector<16x16xf32>
    %cst_95 = arith.constant 0.000000e+00 : f32
    %270 = vector.broadcast %cst_95 : f32 to vector<16x16xf32>
    %271 = arith.cmpf ogt, %269, %270 : vector<16x16xf32>
    %cst_96 = arith.constant 2.000000e-01 : f32
    %272 = vector.broadcast %cst_96 : f32 to vector<16x16xf32>
    %273 = arith.mulf %272, %269 : vector<16x16xf32>
    %274 = arith.select %271, %269, %273 : vector<16x16xi1>, vector<16x16xf32>
    %275 = arith.addf %274, %30 : vector<16x16xf32>
    %cst_97 = arith.constant dense<0xFF800000> : vector<16xf32>
    %276 = vector.multi_reduction <maximumf>, %275, %cst_97 [1] : vector<16x16xf32> to vector<16xf32>
    %277 = vector.shape_cast %276 : vector<16xf32> to vector<16x1xf32>
    %278 = vector.broadcast %277 : vector<16x1xf32> to vector<16x16xf32>
    %279 = arith.subf %275, %278 : vector<16x16xf32>
    %280 = math.exp %279 : vector<16x16xf32>
    %cst_98 = arith.constant dense<0.000000e+00> : vector<16xf32>
    %281 = vector.multi_reduction <add>, %280, %cst_98 [1] : vector<16x16xf32> to vector<16xf32>
    %282 = vector.shape_cast %281 : vector<16xf32> to vector<16x1xf32>
    %283 = arith.truncf %280 : vector<16x16xf32> to vector<16x16xbf16>
    %284 = vector.extract_strided_slice %229 {offsets = [0, 8], sizes = [16, 8], strides = [1, 1]} : vector<16x32xbf16> to vector<16x8xbf16>
    %cst_99 = arith.constant dense<0.000000e+00> : vector<16x8xf32>
    %285 = tpu.matmul %283, %284, %cst_99 {dimension_numbers = #tpu.dot_dimension_numbers<[1], [0], [0], [1], [0, 0, 1, 1], [], []>} : vector<16x16xbf16>, vector<16x8xbf16>, vector<16x8xf32> -> vector<16x8xf32>
    %286 = tpu.reciprocal %282 {approx = true} : vector<16x1xf32> -> vector<16x1xf32>
    %287 = vector.broadcast %286 : vector<16x1xf32> to vector<16x8xf32>
    %288 = arith.mulf %285, %287 : vector<16x8xf32>
    %289 = vector.extract_strided_slice %231 {offsets = [0, 8], sizes = [1, 8], strides = [1, 1]} : vector<1x32xf32> to vector<1x8xf32>
    %290 = vector.broadcast %289 : vector<1x8xf32> to vector<16x8xf32>
    %291 = arith.addf %288, %290 : vector<16x8xf32>
    %cst_100 = arith.constant 0.000000e+00 : f32
    %292 = vector.broadcast %cst_100 : f32 to vector<16x8xf32>
    %293 = arith.cmpf ogt, %291, %292 : vector<16x8xf32>
    %cst_101 = arith.constant 0.00999999977 : f32
    %294 = vector.broadcast %cst_101 : f32 to vector<16x8xf32>
    %295 = arith.mulf %294, %291 : vector<16x8xf32>
    %296 = arith.select %293, %291, %295 : vector<16x8xi1>, vector<16x8xf32>
    %c0_102 = arith.constant 0 : index
    %c8_103 = arith.constant 8 : index
    %297 = vector.load %arg9[%c0_102, %c8_103] : memref<16x32xf32, #tpu.memory_space<vmem>>, vector<16x8xf32>
    tpu.vector_store %arg9[%c0_102, %c8_103], %296 {strides = array<i32>} : memref<16x32xf32, #tpu.memory_space<vmem>>, vector<16x8xf32>,
    %298 = vector.extract_strided_slice %226 {offsets = [0, 2], sizes = [16, 1], strides = [1, 1]} : vector<16x4xf32> to vector<16x1xf32>
    %299 = vector.extract_strided_slice %228 {offsets = [2, 0], sizes = [1, 16], strides = [1, 1]} : vector<4x16xf32> to vector<1x16xf32>
    %300 = vector.broadcast %298 : vector<16x1xf32> to vector<16x16xf32>
    %301 = vector.broadcast %299 : vector<1x16xf32> to vector<16x16xf32>
    %302 = arith.addf %300, %301 : vector<16x16xf32>
    %cst_104 = arith.constant 0.000000e+00 : f32
    %303 = vector.broadcast %cst_104 : f32 to vector<16x16xf32>
    %304 = arith.cmpf ogt, %302, %303 : vector<16x16xf32>
    %cst_105 = arith.constant 2.000000e-01 : f32
    %305 = vector.broadcast %cst_105 : f32 to vector<16x16xf32>
    %306 = arith.mulf %305, %302 : vector<16x16xf32>
    %307 = arith.select %304, %302, %306 : vector<16x16xi1>, vector<16x16xf32>
    %308 = arith.addf %307, %30 : vector<16x16xf32>
    %cst_106 = arith.constant dense<0xFF800000> : vector<16xf32>
    %309 = vector.multi_reduction <maximumf>, %308, %cst_106 [1] : vector<16x16xf32> to vector<16xf32>
    %310 = vector.shape_cast %309 : vector<16xf32> to vector<16x1xf32>
    %311 = vector.broadcast %310 : vector<16x1xf32> to vector<16x16xf32>
    %312 = arith.subf %308, %311 : vector<16x16xf32>
    %313 = math.exp %312 : vector<16x16xf32>
    %cst_107 = arith.constant dense<0.000000e+00> : vector<16xf32>
    %314 = vector.multi_reduction <add>, %313, %cst_107 [1] : vector<16x16xf32> to vector<16xf32>
    %315 = vector.shape_cast %314 : vector<16xf32> to vector<16x1xf32>
    %316 = arith.truncf %313 : vector<16x16xf32> to vector<16x16xbf16>
    %317 = vector.extract_strided_slice %229 {offsets = [0, 16], sizes = [16, 8], strides = [1, 1]} : vector<16x32xbf16> to vector<16x8xbf16>
    %cst_108 = arith.constant dense<0.000000e+00> : vector<16x8xf32>
    %318 = tpu.matmul %316, %317, %cst_108 {dimension_numbers = #tpu.dot_dimension_numbers<[1], [0], [0], [1], [0, 0, 1, 1], [], []>} : vector<16x16xbf16>, vector<16x8xbf16>, vector<16x8xf32> -> vector<16x8xf32>
    %319 = tpu.reciprocal %315 {approx = true} : vector<16x1xf32> -> vector<16x1xf32>
    %320 = vector.broadcast %319 : vector<16x1xf32> to vector<16x8xf32>
    %321 = arith.mulf %318, %320 : vector<16x8xf32>
    %322 = vector.extract_strided_slice %231 {offsets = [0, 16], sizes = [1, 8], strides = [1, 1]} : vector<1x32xf32> to vector<1x8xf32>
    %323 = vector.broadcast %322 : vector<1x8xf32> to vector<16x8xf32>
    %324 = arith.addf %321, %323 : vector<16x8xf32>
    %cst_109 = arith.constant 0.000000e+00 : f32
    %325 = vector.broadcast %cst_109 : f32 to vector<16x8xf32>
    %326 = arith.cmpf ogt, %324, %325 : vector<16x8xf32>
    %cst_110 = arith.constant 0.00999999977 : f32
    %327 = vector.broadcast %cst_110 : f32 to vector<16x8xf32>
    %328 = arith.mulf %327, %324 : vector<16x8xf32>
    %329 = arith.select %326, %324, %328 : vector<16x8xi1>, vector<16x8xf32>
    %c0_111 = arith.constant 0 : index
    %c16_112 = arith.constant 16 : index
    %330 = vector.load %arg9[%c0_111, %c16_112] : memref<16x32xf32, #tpu.memory_space<vmem>>, vector<16x8xf32>
    tpu.vector_store %arg9[%c0_111, %c16_112], %329 {strides = array<i32>} : memref<16x32xf32, #tpu.memory_space<vmem>>, vector<16x8xf32>,
    %331 = vector.extract_strided_slice %226 {offsets = [0, 3], sizes = [16, 1], strides = [1, 1]} : vector<16x4xf32> to vector<16x1xf32>
    %332 = vector.extract_strided_slice %228 {offsets = [3, 0], sizes = [1, 16], strides = [1, 1]} : vector<4x16xf32> to vector<1x16xf32>
    %333 = vector.broadcast %331 : vector<16x1xf32> to vector<16x16xf32>
    %334 = vector.broadcast %332 : vector<1x16xf32> to vector<16x16xf32>
    %335 = arith.addf %333, %334 : vector<16x16xf32>
    %cst_113 = arith.constant 0.000000e+00 : f32
    %336 = vector.broadcast %cst_113 : f32 to vector<16x16xf32>
    %337 = arith.cmpf ogt, %335, %336 : vector<16x16xf32>
    %cst_114 = arith.constant 2.000000e-01 : f32
    %338 = vector.broadcast %cst_114 : f32 to vector<16x16xf32>
    %339 = arith.mulf %338, %335 : vector<16x16xf32>
    %340 = arith.select %337, %335, %339 : vector<16x16xi1>, vector<16x16xf32>
    %341 = arith.addf %340, %30 : vector<16x16xf32>
    %cst_115 = arith.constant dense<0xFF800000> : vector<16xf32>
    %342 = vector.multi_reduction <maximumf>, %341, %cst_115 [1] : vector<16x16xf32> to vector<16xf32>
    %343 = vector.shape_cast %342 : vector<16xf32> to vector<16x1xf32>
    %344 = vector.broadcast %343 : vector<16x1xf32> to vector<16x16xf32>
    %345 = arith.subf %341, %344 : vector<16x16xf32>
    %346 = math.exp %345 : vector<16x16xf32>
    %cst_116 = arith.constant dense<0.000000e+00> : vector<16xf32>
    %347 = vector.multi_reduction <add>, %346, %cst_116 [1] : vector<16x16xf32> to vector<16xf32>
    %348 = vector.shape_cast %347 : vector<16xf32> to vector<16x1xf32>
    %349 = arith.truncf %346 : vector<16x16xf32> to vector<16x16xbf16>
    %350 = vector.extract_strided_slice %229 {offsets = [0, 24], sizes = [16, 8], strides = [1, 1]} : vector<16x32xbf16> to vector<16x8xbf16>
    %cst_117 = arith.constant dense<0.000000e+00> : vector<16x8xf32>
    %351 = tpu.matmul %349, %350, %cst_117 {dimension_numbers = #tpu.dot_dimension_numbers<[1], [0], [0], [1], [0, 0, 1, 1], [], []>} : vector<16x16xbf16>, vector<16x8xbf16>, vector<16x8xf32> -> vector<16x8xf32>
    %352 = tpu.reciprocal %348 {approx = true} : vector<16x1xf32> -> vector<16x1xf32>
    %353 = vector.broadcast %352 : vector<16x1xf32> to vector<16x8xf32>
    %354 = arith.mulf %351, %353 : vector<16x8xf32>
    %355 = vector.extract_strided_slice %231 {offsets = [0, 24], sizes = [1, 8], strides = [1, 1]} : vector<1x32xf32> to vector<1x8xf32>
    %356 = vector.broadcast %355 : vector<1x8xf32> to vector<16x8xf32>
    %357 = arith.addf %354, %356 : vector<16x8xf32>
    %cst_118 = arith.constant 0.000000e+00 : f32
    %358 = vector.broadcast %cst_118 : f32 to vector<16x8xf32>
    %359 = arith.cmpf ogt, %357, %358 : vector<16x8xf32>
    %cst_119 = arith.constant 0.00999999977 : f32
    %360 = vector.broadcast %cst_119 : f32 to vector<16x8xf32>
    %361 = arith.mulf %360, %357 : vector<16x8xf32>
    %362 = arith.select %359, %357, %361 : vector<16x8xi1>, vector<16x8xf32>
    %c0_120 = arith.constant 0 : index
    %c24_121 = arith.constant 24 : index
    %363 = vector.load %arg9[%c0_120, %c24_121] : memref<16x32xf32, #tpu.memory_space<vmem>>, vector<16x8xf32>
    tpu.vector_store %arg9[%c0_120, %c24_121], %362 {strides = array<i32>} : memref<16x32xf32, #tpu.memory_space<vmem>>, vector<16x8xf32>,
    %c0_122 = arith.constant 0 : index
    %c0_123 = arith.constant 0 : index
    %364 = vector.load %arg9[%c0_122, %c0_123] : memref<16x32xf32, #tpu.memory_space<vmem>>, vector<16x32xf32>
    %cst_124 = arith.constant dense<0.000000e+00> : vector<32xf32>
    %365 = vector.multi_reduction <add>, %364, %cst_124 [0] : vector<16x32xf32> to vector<32xf32>
    %366 = vector.shape_cast %365 : vector<32xf32> to vector<1x32xf32>
    %cst_125 = arith.constant 1.600000e+01 : f32
    %367 = vector.broadcast %cst_125 : f32 to vector<1x32xf32>
    %368 = arith.divf %366, %367 : vector<1x32xf32>
    %369 = vector.broadcast %368 : vector<1x32xf32> to vector<16x32xf32>
    %370 = arith.subf %364, %369 : vector<16x32xf32>
    %371 = arith.mulf %370, %370 : vector<16x32xf32>
    %cst_126 = arith.constant dense<0.000000e+00> : vector<32xf32>
    %372 = vector.multi_reduction <add>, %371, %cst_126 [0] : vector<16x32xf32> to vector<32xf32>
    %373 = vector.shape_cast %372 : vector<32xf32> to vector<1x32xf32>
    %cst_127 = arith.constant 1.600000e+01 : f32
    %374 = vector.broadcast %cst_127 : f32 to vector<1x32xf32>
    %375 = arith.divf %373, %374 : vector<1x32xf32>
    %376 = vector.broadcast %368 : vector<1x32xf32> to vector<16x32xf32>
    %377 = arith.subf %364, %376 : vector<16x32xf32>
    %cst_128 = arith.constant 9.99999974E-6 : f32
    %378 = vector.broadcast %cst_128 : f32 to vector<1x32xf32>
    %379 = arith.addf %375, %378 : vector<1x32xf32>
    %380 = math.rsqrt %379 : vector<1x32xf32>
    %381 = vector.broadcast %380 : vector<1x32xf32> to vector<16x32xf32>
    %382 = arith.mulf %377, %381 : vector<16x32xf32>
    %c2 = arith.constant 2 : index
    %c0_129 = arith.constant 0 : index
    %c0_130 = arith.constant 0 : index
    %383 = vector.load %arg3[%c2, %c0_129, %c0_130] : memref<3x32x32xf32, #tpu.memory_space<vmem>>, vector<1x32x32xf32>
    %384 = vector.shape_cast %383 : vector<1x32x32xf32> to vector<32x32xf32>
    %cst_131 = arith.constant dense<0.000000e+00> : vector<16x32xf32>
    %385 = tpu.matmul %382, %384, %cst_131 {dimension_numbers = #tpu.dot_dimension_numbers<[1], [0], [0], [1], [0, 0, 1, 1], [], []>} : vector<16x32xf32>, vector<32x32xf32>, vector<16x32xf32> -> vector<16x32xf32>
    %c2_132 = arith.constant 2 : index
    %c0_133 = arith.constant 0 : index
    %c0_134 = arith.constant 0 : index
    %386 = vector.load %arg4[%c2_132, %c0_133, %c0_134] : memref<3x1x32xf32, #tpu.memory_space<vmem>>, vector<1x1x32xf32>
    %387 = vector.shape_cast %386 : vector<1x1x32xf32> to vector<1x32xf32>
    %388 = vector.broadcast %387 : vector<1x32xf32> to vector<16x32xf32>
    %389 = arith.addf %385, %388 : vector<16x32xf32>
    %c2_135 = arith.constant 2 : index
    %c0_136 = arith.constant 0 : index
    %c0_137 = arith.constant 0 : index
    %390 = vector.load %arg5[%c2_135, %c0_136, %c0_137] : memref<3x32x8xf32, #tpu.memory_space<vmem>>, vector<1x32x8xf32>
    %391 = vector.shape_cast %390 : vector<1x32x8xf32> to vector<32x8xf32>
    %cst_138 = arith.constant dense<0.000000e+00> : vector<16x8xf32>
    %392 = tpu.matmul %389, %391, %cst_138 {dimension_numbers = #tpu.dot_dimension_numbers<[1], [0], [0], [1], [0, 0, 1, 1], [], []>} : vector<16x32xf32>, vector<32x8xf32>, vector<16x8xf32> -> vector<16x8xf32>
    %393 = vector.extract_strided_slice %392 {offsets = [0, 4], sizes = [16, 4], strides = [1, 1]} : vector<16x8xf32> to vector<16x4xf32>
    %394 = vector.extract_strided_slice %392 {offsets = [0, 0], sizes = [16, 4], strides = [1, 1]} : vector<16x8xf32> to vector<16x4xf32>
    %395 = tpu.transpose %394, [1, 0] : vector<16x4xf32> -> vector<4x16xf32>
    %396 = arith.truncf %389 : vector<16x32xf32> to vector<16x32xbf16>
    %c2_139 = arith.constant 2 : index
    %c0_140 = arith.constant 0 : index
    %c0_141 = arith.constant 0 : index
    %397 = vector.load %arg6[%c2_139, %c0_140, %c0_141] : memref<3x1x32xf32, #tpu.memory_space<vmem>>, vector<1x1x32xf32>
    %398 = vector.shape_cast %397 : vector<1x1x32xf32> to vector<1x32xf32>
    %399 = vector.extract_strided_slice %393 {offsets = [0, 0], sizes = [16, 1], strides = [1, 1]} : vector<16x4xf32> to vector<16x1xf32>
    %400 = vector.extract_strided_slice %395 {offsets = [0, 0], sizes = [1, 16], strides = [1, 1]} : vector<4x16xf32> to vector<1x16xf32>
    %401 = vector.broadcast %399 : vector<16x1xf32> to vector<16x16xf32>
    %402 = vector.broadcast %400 : vector<1x16xf32> to vector<16x16xf32>
    %403 = arith.addf %401, %402 : vector<16x16xf32>
    %cst_142 = arith.constant 0.000000e+00 : f32
    %404 = vector.broadcast %cst_142 : f32 to vector<16x16xf32>
    %405 = arith.cmpf ogt, %403, %404 : vector<16x16xf32>
    %cst_143 = arith.constant 2.000000e-01 : f32
    %406 = vector.broadcast %cst_143 : f32 to vector<16x16xf32>
    %407 = arith.mulf %406, %403 : vector<16x16xf32>
    %408 = arith.select %405, %403, %407 : vector<16x16xi1>, vector<16x16xf32>
    %409 = arith.addf %408, %30 : vector<16x16xf32>
    %cst_144 = arith.constant dense<0xFF800000> : vector<16xf32>
    %410 = vector.multi_reduction <maximumf>, %409, %cst_144 [1] : vector<16x16xf32> to vector<16xf32>
    %411 = vector.shape_cast %410 : vector<16xf32> to vector<16x1xf32>
    %412 = vector.broadcast %411 : vector<16x1xf32> to vector<16x16xf32>
    %413 = arith.subf %409, %412 : vector<16x16xf32>
    %414 = math.exp %413 : vector<16x16xf32>
    %cst_145 = arith.constant dense<0.000000e+00> : vector<16xf32>
    %415 = vector.multi_reduction <add>, %414, %cst_145 [1] : vector<16x16xf32> to vector<16xf32>
    %416 = vector.shape_cast %415 : vector<16xf32> to vector<16x1xf32>
    %417 = arith.truncf %414 : vector<16x16xf32> to vector<16x16xbf16>
    %418 = vector.extract_strided_slice %396 {offsets = [0, 0], sizes = [16, 8], strides = [1, 1]} : vector<16x32xbf16> to vector<16x8xbf16>
    %cst_146 = arith.constant dense<0.000000e+00> : vector<16x8xf32>
    %419 = tpu.matmul %417, %418, %cst_146 {dimension_numbers = #tpu.dot_dimension_numbers<[1], [0], [0], [1], [0, 0, 1, 1], [], []>} : vector<16x16xbf16>, vector<16x8xbf16>, vector<16x8xf32> -> vector<16x8xf32>
    %420 = tpu.reciprocal %416 {approx = true} : vector<16x1xf32> -> vector<16x1xf32>
    %421 = vector.broadcast %420 : vector<16x1xf32> to vector<16x8xf32>
    %422 = arith.mulf %419, %421 : vector<16x8xf32>
    %423 = vector.extract_strided_slice %398 {offsets = [0, 0], sizes = [1, 8], strides = [1, 1]} : vector<1x32xf32> to vector<1x8xf32>
    %424 = vector.broadcast %423 : vector<1x8xf32> to vector<16x8xf32>
    %425 = arith.addf %422, %424 : vector<16x8xf32>
    %cst_147 = arith.constant 0.000000e+00 : f32
    %426 = vector.broadcast %cst_147 : f32 to vector<16x8xf32>
    %427 = arith.cmpf ogt, %425, %426 : vector<16x8xf32>
    %cst_148 = arith.constant 0.00999999977 : f32
    %428 = vector.broadcast %cst_148 : f32 to vector<16x8xf32>
    %429 = arith.mulf %428, %425 : vector<16x8xf32>
    %430 = arith.select %427, %425, %429 : vector<16x8xi1>, vector<16x8xf32>
    %c0_149 = arith.constant 0 : index
    %c0_150 = arith.constant 0 : index
    %431 = vector.load %arg9[%c0_149, %c0_150] : memref<16x32xf32, #tpu.memory_space<vmem>>, vector<16x8xf32>
    tpu.vector_store %arg9[%c0_149, %c0_150], %430 {strides = array<i32>} : memref<16x32xf32, #tpu.memory_space<vmem>>, vector<16x8xf32>,
    %432 = vector.extract_strided_slice %393 {offsets = [0, 1], sizes = [16, 1], strides = [1, 1]} : vector<16x4xf32> to vector<16x1xf32>
    %433 = vector.extract_strided_slice %395 {offsets = [1, 0], sizes = [1, 16], strides = [1, 1]} : vector<4x16xf32> to vector<1x16xf32>
    %434 = vector.broadcast %432 : vector<16x1xf32> to vector<16x16xf32>
    %435 = vector.broadcast %433 : vector<1x16xf32> to vector<16x16xf32>
    %436 = arith.addf %434, %435 : vector<16x16xf32>
    %cst_151 = arith.constant 0.000000e+00 : f32
    %437 = vector.broadcast %cst_151 : f32 to vector<16x16xf32>
    %438 = arith.cmpf ogt, %436, %437 : vector<16x16xf32>
    %cst_152 = arith.constant 2.000000e-01 : f32
    %439 = vector.broadcast %cst_152 : f32 to vector<16x16xf32>
    %440 = arith.mulf %439, %436 : vector<16x16xf32>
    %441 = arith.select %438, %436, %440 : vector<16x16xi1>, vector<16x16xf32>
    %442 = arith.addf %441, %30 : vector<16x16xf32>
    %cst_153 = arith.constant dense<0xFF800000> : vector<16xf32>
    %443 = vector.multi_reduction <maximumf>, %442, %cst_153 [1] : vector<16x16xf32> to vector<16xf32>
    %444 = vector.shape_cast %443 : vector<16xf32> to vector<16x1xf32>
    %445 = vector.broadcast %444 : vector<16x1xf32> to vector<16x16xf32>
    %446 = arith.subf %442, %445 : vector<16x16xf32>
    %447 = math.exp %446 : vector<16x16xf32>
    %cst_154 = arith.constant dense<0.000000e+00> : vector<16xf32>
    %448 = vector.multi_reduction <add>, %447, %cst_154 [1] : vector<16x16xf32> to vector<16xf32>
    %449 = vector.shape_cast %448 : vector<16xf32> to vector<16x1xf32>
    %450 = arith.truncf %447 : vector<16x16xf32> to vector<16x16xbf16>
    %451 = vector.extract_strided_slice %396 {offsets = [0, 8], sizes = [16, 8], strides = [1, 1]} : vector<16x32xbf16> to vector<16x8xbf16>
    %cst_155 = arith.constant dense<0.000000e+00> : vector<16x8xf32>
    %452 = tpu.matmul %450, %451, %cst_155 {dimension_numbers = #tpu.dot_dimension_numbers<[1], [0], [0], [1], [0, 0, 1, 1], [], []>} : vector<16x16xbf16>, vector<16x8xbf16>, vector<16x8xf32> -> vector<16x8xf32>
    %453 = tpu.reciprocal %449 {approx = true} : vector<16x1xf32> -> vector<16x1xf32>
    %454 = vector.broadcast %453 : vector<16x1xf32> to vector<16x8xf32>
    %455 = arith.mulf %452, %454 : vector<16x8xf32>
    %456 = vector.extract_strided_slice %398 {offsets = [0, 8], sizes = [1, 8], strides = [1, 1]} : vector<1x32xf32> to vector<1x8xf32>
    %457 = vector.broadcast %456 : vector<1x8xf32> to vector<16x8xf32>
    %458 = arith.addf %455, %457 : vector<16x8xf32>
    %cst_156 = arith.constant 0.000000e+00 : f32
    %459 = vector.broadcast %cst_156 : f32 to vector<16x8xf32>
    %460 = arith.cmpf ogt, %458, %459 : vector<16x8xf32>
    %cst_157 = arith.constant 0.00999999977 : f32
    %461 = vector.broadcast %cst_157 : f32 to vector<16x8xf32>
    %462 = arith.mulf %461, %458 : vector<16x8xf32>
    %463 = arith.select %460, %458, %462 : vector<16x8xi1>, vector<16x8xf32>
    %c0_158 = arith.constant 0 : index
    %c8_159 = arith.constant 8 : index
    %464 = vector.load %arg9[%c0_158, %c8_159] : memref<16x32xf32, #tpu.memory_space<vmem>>, vector<16x8xf32>
    tpu.vector_store %arg9[%c0_158, %c8_159], %463 {strides = array<i32>} : memref<16x32xf32, #tpu.memory_space<vmem>>, vector<16x8xf32>,
    %465 = vector.extract_strided_slice %393 {offsets = [0, 2], sizes = [16, 1], strides = [1, 1]} : vector<16x4xf32> to vector<16x1xf32>
    %466 = vector.extract_strided_slice %395 {offsets = [2, 0], sizes = [1, 16], strides = [1, 1]} : vector<4x16xf32> to vector<1x16xf32>
    %467 = vector.broadcast %465 : vector<16x1xf32> to vector<16x16xf32>
    %468 = vector.broadcast %466 : vector<1x16xf32> to vector<16x16xf32>
    %469 = arith.addf %467, %468 : vector<16x16xf32>
    %cst_160 = arith.constant 0.000000e+00 : f32
    %470 = vector.broadcast %cst_160 : f32 to vector<16x16xf32>
    %471 = arith.cmpf ogt, %469, %470 : vector<16x16xf32>
    %cst_161 = arith.constant 2.000000e-01 : f32
    %472 = vector.broadcast %cst_161 : f32 to vector<16x16xf32>
    %473 = arith.mulf %472, %469 : vector<16x16xf32>
    %474 = arith.select %471, %469, %473 : vector<16x16xi1>, vector<16x16xf32>
    %475 = arith.addf %474, %30 : vector<16x16xf32>
    %cst_162 = arith.constant dense<0xFF800000> : vector<16xf32>
    %476 = vector.multi_reduction <maximumf>, %475, %cst_162 [1] : vector<16x16xf32> to vector<16xf32>
    %477 = vector.shape_cast %476 : vector<16xf32> to vector<16x1xf32>
    %478 = vector.broadcast %477 : vector<16x1xf32> to vector<16x16xf32>
    %479 = arith.subf %475, %478 : vector<16x16xf32>
    %480 = math.exp %479 : vector<16x16xf32>
    %cst_163 = arith.constant dense<0.000000e+00> : vector<16xf32>
    %481 = vector.multi_reduction <add>, %480, %cst_163 [1] : vector<16x16xf32> to vector<16xf32>
    %482 = vector.shape_cast %481 : vector<16xf32> to vector<16x1xf32>
    %483 = arith.truncf %480 : vector<16x16xf32> to vector<16x16xbf16>
    %484 = vector.extract_strided_slice %396 {offsets = [0, 16], sizes = [16, 8], strides = [1, 1]} : vector<16x32xbf16> to vector<16x8xbf16>
    %cst_164 = arith.constant dense<0.000000e+00> : vector<16x8xf32>
    %485 = tpu.matmul %483, %484, %cst_164 {dimension_numbers = #tpu.dot_dimension_numbers<[1], [0], [0], [1], [0, 0, 1, 1], [], []>} : vector<16x16xbf16>, vector<16x8xbf16>, vector<16x8xf32> -> vector<16x8xf32>
    %486 = tpu.reciprocal %482 {approx = true} : vector<16x1xf32> -> vector<16x1xf32>
    %487 = vector.broadcast %486 : vector<16x1xf32> to vector<16x8xf32>
    %488 = arith.mulf %485, %487 : vector<16x8xf32>
    %489 = vector.extract_strided_slice %398 {offsets = [0, 16], sizes = [1, 8], strides = [1, 1]} : vector<1x32xf32> to vector<1x8xf32>
    %490 = vector.broadcast %489 : vector<1x8xf32> to vector<16x8xf32>
    %491 = arith.addf %488, %490 : vector<16x8xf32>
    %cst_165 = arith.constant 0.000000e+00 : f32
    %492 = vector.broadcast %cst_165 : f32 to vector<16x8xf32>
    %493 = arith.cmpf ogt, %491, %492 : vector<16x8xf32>
    %cst_166 = arith.constant 0.00999999977 : f32
    %494 = vector.broadcast %cst_166 : f32 to vector<16x8xf32>
    %495 = arith.mulf %494, %491 : vector<16x8xf32>
    %496 = arith.select %493, %491, %495 : vector<16x8xi1>, vector<16x8xf32>
    %c0_167 = arith.constant 0 : index
    %c16_168 = arith.constant 16 : index
    %497 = vector.load %arg9[%c0_167, %c16_168] : memref<16x32xf32, #tpu.memory_space<vmem>>, vector<16x8xf32>
    tpu.vector_store %arg9[%c0_167, %c16_168], %496 {strides = array<i32>} : memref<16x32xf32, #tpu.memory_space<vmem>>, vector<16x8xf32>,
    %498 = vector.extract_strided_slice %393 {offsets = [0, 3], sizes = [16, 1], strides = [1, 1]} : vector<16x4xf32> to vector<16x1xf32>
    %499 = vector.extract_strided_slice %395 {offsets = [3, 0], sizes = [1, 16], strides = [1, 1]} : vector<4x16xf32> to vector<1x16xf32>
    %500 = vector.broadcast %498 : vector<16x1xf32> to vector<16x16xf32>
    %501 = vector.broadcast %499 : vector<1x16xf32> to vector<16x16xf32>
    %502 = arith.addf %500, %501 : vector<16x16xf32>
    %cst_169 = arith.constant 0.000000e+00 : f32
    %503 = vector.broadcast %cst_169 : f32 to vector<16x16xf32>
    %504 = arith.cmpf ogt, %502, %503 : vector<16x16xf32>
    %cst_170 = arith.constant 2.000000e-01 : f32
    %505 = vector.broadcast %cst_170 : f32 to vector<16x16xf32>
    %506 = arith.mulf %505, %502 : vector<16x16xf32>
    %507 = arith.select %504, %502, %506 : vector<16x16xi1>, vector<16x16xf32>
    %508 = arith.addf %507, %30 : vector<16x16xf32>
    %cst_171 = arith.constant dense<0xFF800000> : vector<16xf32>
    %509 = vector.multi_reduction <maximumf>, %508, %cst_171 [1] : vector<16x16xf32> to vector<16xf32>
    %510 = vector.shape_cast %509 : vector<16xf32> to vector<16x1xf32>
    %511 = vector.broadcast %510 : vector<16x1xf32> to vector<16x16xf32>
    %512 = arith.subf %508, %511 : vector<16x16xf32>
    %513 = math.exp %512 : vector<16x16xf32>
    %cst_172 = arith.constant dense<0.000000e+00> : vector<16xf32>
    %514 = vector.multi_reduction <add>, %513, %cst_172 [1] : vector<16x16xf32> to vector<16xf32>
    %515 = vector.shape_cast %514 : vector<16xf32> to vector<16x1xf32>
    %516 = arith.truncf %513 : vector<16x16xf32> to vector<16x16xbf16>
    %517 = vector.extract_strided_slice %396 {offsets = [0, 24], sizes = [16, 8], strides = [1, 1]} : vector<16x32xbf16> to vector<16x8xbf16>
    %cst_173 = arith.constant dense<0.000000e+00> : vector<16x8xf32>
    %518 = tpu.matmul %516, %517, %cst_173 {dimension_numbers = #tpu.dot_dimension_numbers<[1], [0], [0], [1], [0, 0, 1, 1], [], []>} : vector<16x16xbf16>, vector<16x8xbf16>, vector<16x8xf32> -> vector<16x8xf32>
    %519 = tpu.reciprocal %515 {approx = true} : vector<16x1xf32> -> vector<16x1xf32>
    %520 = vector.broadcast %519 : vector<16x1xf32> to vector<16x8xf32>
    %521 = arith.mulf %518, %520 : vector<16x8xf32>
    %522 = vector.extract_strided_slice %398 {offsets = [0, 24], sizes = [1, 8], strides = [1, 1]} : vector<1x32xf32> to vector<1x8xf32>
    %523 = vector.broadcast %522 : vector<1x8xf32> to vector<16x8xf32>
    %524 = arith.addf %521, %523 : vector<16x8xf32>
    %cst_174 = arith.constant 0.000000e+00 : f32
    %525 = vector.broadcast %cst_174 : f32 to vector<16x8xf32>
    %526 = arith.cmpf ogt, %524, %525 : vector<16x8xf32>
    %cst_175 = arith.constant 0.00999999977 : f32
    %527 = vector.broadcast %cst_175 : f32 to vector<16x8xf32>
    %528 = arith.mulf %527, %524 : vector<16x8xf32>
    %529 = arith.select %526, %524, %528 : vector<16x8xi1>, vector<16x8xf32>
    %c0_176 = arith.constant 0 : index
    %c24_177 = arith.constant 24 : index
    %530 = vector.load %arg9[%c0_176, %c24_177] : memref<16x32xf32, #tpu.memory_space<vmem>>, vector<16x8xf32>
    tpu.vector_store %arg9[%c0_176, %c24_177], %529 {strides = array<i32>} : memref<16x32xf32, #tpu.memory_space<vmem>>, vector<16x8xf32>,
    %c0_178 = arith.constant 0 : index
    %c0_179 = arith.constant 0 : index
    %531 = vector.load %arg9[%c0_178, %c0_179] : memref<16x32xf32, #tpu.memory_space<vmem>>, vector<16x32xf32>
    %c0_180 = arith.constant 0 : index
    %c0_181 = arith.constant 0 : index
    %532 = vector.load %arg8[%c0_180, %c0_181] : memref<2x16xbf16, #tpu.memory_space<vmem>>, vector<2x16xbf16>
    %533 = arith.extf %532 : vector<2x16xbf16> to vector<2x16xf32>
    %cst_182 = arith.constant dense<0.000000e+00> : vector<2x32xf32>
    %534 = tpu.matmul %533, %531, %cst_182 {dimension_numbers = #tpu.dot_dimension_numbers<[1], [0], [0], [1], [0, 0, 1, 1], [], []>} : vector<2x16xf32>, vector<16x32xf32>, vector<2x32xf32> -> vector<2x32xf32>
    %c0_183 = arith.constant 0 : index
    %c0_184 = arith.constant 0 : index
    %535 = vector.load %arg10[%c0_183, %c0_184] : memref<2x32xf32, #tpu.memory_space<vmem>>, vector<2x32xf32>
    tpu.vector_store %arg10[%c0_183, %c0_184], %534 {strides = array<i32>} : memref<2x32xf32, #tpu.memory_space<vmem>>, vector<2x32xf32>,
    return
  }
}

</mosaic_0001>

<llo_original>
// kernel: tpu_custom_call.1
$region0: #{tpu_custom_call.1}
  #allocation0 [shape = 'u32[]', space=smem, size = 0x4, offset = 0x4, fixed_abs, tag = 'smem constant byte address 0x4 - core index']
  #allocation1 [shape = 'u32[72,128]{1,0:T(1,128)}', space=vmem, size = 0x9000, scoped, tag = 'internal scratch']
  %s0 = inlined_call_operand.vmem [shape: f32[16,8], index: 0, kind: input, shape index: {}]
  %s1 = inlined_call_operand.vmem [shape: f32[8,32], index: 1, kind: input, shape index: {}]
  %s2 = inlined_call_operand.vmem [shape: f32[1,32], index: 2, kind: input, shape index: {}]
  %s3 = inlined_call_operand.vmem [shape: f32[3,32,32], index: 3, kind: input, shape index: {}]
  %s4 = inlined_call_operand.vmem [shape: f32[3,1,32], index: 4, kind: input, shape index: {}]
  %s5 = inlined_call_operand.vmem [shape: f32[3,32,8], index: 5, kind: input, shape index: {}]
  %s6 = inlined_call_operand.vmem [shape: f32[3,1,32], index: 6, kind: input, shape index: {}]
  %s7 = inlined_call_operand.vmem [shape: bf16[16,16], index: 7, kind: input, shape index: {}]
  %s8 = inlined_call_operand.vmem [shape: bf16[2,16], index: 8, kind: input, shape index: {}]
  %s9 = inlined_call_operand.hbm [shape: f32[16,32], index: 9, kind: output, shape index: {0}]
  %s10 = inlined_call_operand.hbm [shape: f32[2,32], index: 10, kind: output, shape index: {1}]
  %11 = xla_tuple %s9, %s10
  %s12 = sld [smem:[#allocation0]]
  $region54: #{tpu_custom_call.1} parent=0
    _
  %s14 = ssub.s32 1, %s12
  %s15 = scalar_select 0, %s14, %s12
  $region1: #{tpu_custom_call.1} parent=0
    #allocation2 [shape = 'u8[8192]{0}', space=vmem, size = 0x2000, scoped, tag = 'output window, operand 0, single buffered']
    #allocation3 [shape = 's32[1]{0}', space=sflag, size = 0x4, scoped, tag = 'scoped memory for tpu_custom_call.1']
    #allocation4 [shape = 'u8[1024]{0}', space=vmem, size = 0x400, scoped, tag = 'output window, operand 1, single buffered']
    #allocation5 [shape = 's32[1]{0}', space=sflag, size = 0x4, scoped, tag = 'scoped memory for tpu_custom_call.1']
    %16 = vsyncpa [#allocation3], 0
    %17 = vsyncpa [#allocation5], 0
    // Predicated region
    $region2: #{tpu_custom_call.1} parent=1 // pred_check
      _
    $region3: #{tpu_custom_call.1} parent=1 // pred_check_branch
      %19 = sbr.rel (0) target = $region5
    $region4: #{tpu_custom_call.1} parent=1 // pred_region
      _
    $region5: #{tpu_custom_call.1} parent=1 // pred_fallthru
      _
    // Predicated region
    $region6: #{tpu_custom_call.1} parent=1 // pred_check
      _
    $region7: #{tpu_custom_call.1} parent=1 // pred_check_branch
      %21 = sbr.rel (0) target = $region9
    $region8: #{tpu_custom_call.1} parent=1 // pred_region
      _
    $region9: #{tpu_custom_call.1} parent=1 // pred_fallthru
      _
    // Predicated region
    $region10: #{tpu_custom_call.1} parent=1 // pred_check
      _
    $region11: #{tpu_custom_call.1} parent=1 // pred_check_branch
      %23 = sbr.rel (0) target = $region13
    $region12: #{tpu_custom_call.1} parent=1 // pred_region
      _
    $region13: #{tpu_custom_call.1} parent=1 // pred_fallthru
      _
    // Predicated region
    $region14: #{tpu_custom_call.1} parent=1 // pred_check
      _
    $region15: #{tpu_custom_call.1} parent=1 // pred_check_branch
      %25 = sbr.rel (0) target = $region17
    $region16: #{tpu_custom_call.1} parent=1 // pred_region
      _
    $region17: #{tpu_custom_call.1} parent=1 // pred_fallthru
      _
    // Predicated region
    $region18: #{tpu_custom_call.1} parent=1 // pred_check
      _
    $region19: #{tpu_custom_call.1} parent=1 // pred_check_branch
      %27 = sbr.rel (0) target = $region21
    $region20: #{tpu_custom_call.1} parent=1 // pred_region
      _
    $region21: #{tpu_custom_call.1} parent=1 // pred_fallthru
      _
    // Predicated region
    $region22: #{tpu_custom_call.1} parent=1 // pred_check
      _
    $region23: #{tpu_custom_call.1} parent=1 // pred_check_branch
      %29 = sbr.rel (0) target = $region25
    $region24: #{tpu_custom_call.1} parent=1 // pred_region
      _
    $region25: #{tpu_custom_call.1} parent=1 // pred_fallthru
      _
    // Predicated region
    $region26: #{tpu_custom_call.1} parent=1 // pred_check
      _
    $region27: #{tpu_custom_call.1} parent=1 // pred_check_branch
      %31 = sbr.rel (0) target = $region29
    $region28: #{tpu_custom_call.1} parent=1 // pred_region
      _
    $region29: #{tpu_custom_call.1} parent=1 // pred_fallthru
      _
    // Predicated region
    $region30: #{tpu_custom_call.1} parent=1 // pred_check
      _
    $region31: #{tpu_custom_call.1} parent=1 // pred_check_branch
      %33 = sbr.rel (0) target = $region33
    $region32: #{tpu_custom_call.1} parent=1 // pred_region
      _
    $region33: #{tpu_custom_call.1} parent=1 // pred_fallthru
      _
    // Predicated region
    $region34: #{tpu_custom_call.1} parent=1 // pred_check
      _
    $region35: #{tpu_custom_call.1} parent=1 // pred_check_branch
      %35 = sbr.rel (0) target = $region37
    $region36: #{tpu_custom_call.1} parent=1 // pred_region
      _
    $region37: #{tpu_custom_call.1} parent=1 // pred_fallthru
      _
    %v37 = vld [vmem:[%s0] sm:$0xff]
    %v38 = vld [vmem:[%s0 + $0x8] sm:$0xff]
    %vm39 = vcmask 64512
    %v40 = vsel %vm39, %v37, 0.0
    %v41 = vsel %vm39, %v38, 0.0
    %v42 = vadd.f32 %v40, %v41
    %v43 = vrot.slane %v42, 4
    %v44 = vadd.f32 %v42, %v43
    %v45 = vrot.slane %v44, 2
    %v46 = vadd.f32 %v44, %v45
    %v47 = vrot.slane %v46, 1
    %v48 = vadd.f32 %v46, %v47
    %v49 = vrcp.pop 16.0
    %v50 = vmul.f32 16.0, %v49
    %v51 = vsub.f32 1.0, %v50
    %v52 = vmul.f32 %v49, %v51
    %v53 = vadd.f32 %v49, %v52
    %vm54 = vweird.f32 %v49
    %v55 = vsel %vm54, %v49, %v53
    %v56 = vmul.f32 %v48, %v55
    %v57 = vsub.f32 %v37, %v56
    %v58 = vsub.f32 %v38, %v56
    %v59 = vmul.f32 %v57, %v57
    %v60 = vmul.f32 %v58, %v58
    %v61 = vsel %vm39, %v59, 0.0
    %v62 = vsel %vm39, %v60, 0.0
    %v63 = vadd.f32 %v61, %v62
    %v64 = vrot.slane %v63, 4
    %v65 = vadd.f32 %v63, %v64
    %v66 = vrot.slane %v65, 2
    %v67 = vadd.f32 %v65, %v66
    %v68 = vrot.slane %v67, 1
    %v69 = vadd.f32 %v67, %v68
    %v70 = vmul.f32 %v69, %v55
    %v71 = vadd.f32 %v70, 1e-05
    %v72 = vrsqrt.pop %v71
    %v73 = vmul.f32 %v72, %v71
    %v74 = vmul.f32 %v73, %v72
    %v75 = vmul.f32 0.5, %v74
    %v76 = vsub.f32 1.5, %v75
    %v77 = vmul.f32 %v72, %v76
    %vm78 = vweird.f32 %v71
    %vm79 = vweird.f32 %v72
    %vm80 = vmor %vm78, %vm79
    %v81 = vsel %vm80, %v72, %v77
    %v82 = vmul.f32 %v57, %v81
    %v83 = vmul.f32 %v58, %v81
    %v84 = vld [vmem:[%s1] sm:$0xff]
    %v85 = vld [vmem:[%s2] sm:$0x1]
    %v87 = vperm.slane %v85, 0
    %v90 = vsel %vm39, %v82, 0
    %v93 = vsel %vm39, %v83, 0
    %95 = vmatpush.msra.mxu0 0.0
    %96 = vmatpush.msra.mxu0 0.0
    %97 = vmatpush.msra.mxu0 0.0
    %98 = vmatpush.msra.mxu0 0.0
    %99 = vmatpush.msra.mxu0 0.0
    %100 = vmatpush.msra.mxu0 0.0
    %101 = vmatpush.msra.mxu0 0.0
    %102 = vmatpush.msra.mxu0 0.0
    %103 = vmatpush.msra.mxu0 0.0
    %104 = vmatpush.msra.mxu0 0.0
    %105 = vmatpush.msra.mxu0 0.0
    %106 = vmatpush.msra.mxu0 0.0
    %107 = vmatpush.msra.mxu0 0.0
    %108 = vmatpush.msra.mxu0 0.0
    %109 = vmatpush.msra.mxu0 0.0
    %110 = vmatpush.msra.mxu0 %v84
    %111 = vmatmul.f32.gmra.mxu0 %v90
    %v112 = vpop.f32.mrf.mxu0
    %v113 = vadd.f32 %v87, %v112
    %114 = vmatmul.f32.gmra.mxu0 %v93
    %v115 = vpop.f32.mrf.mxu0
    %v116 = vadd.f32 %v87, %v115
    %117 = vdwg.mxu0
    %vm118 = vcmp.gt.f32.partialorder %v113, 0.0
    %vm119 = vcmp.gt.f32.partialorder %v116, 0.0
    %v120 = vmul.f32 %v113, 0.01
    %v121 = vmul.f32 %v116, 0.01
    %v122 = vsel %vm118, %v113, %v120
    %v123 = vsel %vm119, %v116, %v121
    %v124 = vld [vmem:[%s7] sm:$0xf]
    %v125 = vld [vmem:[%s7 + $0x4] sm:$0xf]
    %v126 = vunpack.c.l.bf16 %v124
    %v127 = vunpack.c.l.bf16 %v125
    %vm128 = vcmask 261120
    %v129 = vsel %vm128, %v122, 0.0
    %v130 = vsel %vm128, %v123, 0.0
    %v131 = vadd.f32 %v129, %v130
    %v132 = vrot.slane %v131, 4
    %v133 = vadd.f32 %v131, %v132
    %v134 = vrot.slane %v133, 2
    %v135 = vadd.f32 %v133, %v134
    %v136 = vrot.slane %v135, 1
    %v137 = vadd.f32 %v135, %v136
    %v138 = vmul.f32 %v137, %v55
    %v139 = vsub.f32 %v122, %v138
    %v140 = vsub.f32 %v123, %v138
    %v141 = vmul.f32 %v139, %v139
    %v142 = vmul.f32 %v140, %v140
    %v143 = vsel %vm128, %v141, 0.0
    %v144 = vsel %vm128, %v142, 0.0
    %v145 = vadd.f32 %v143, %v144
    %v146 = vrot.slane %v145, 4
    %v147 = vadd.f32 %v145, %v146
    %v148 = vrot.slane %v147, 2
    %v149 = vadd.f32 %v147, %v148
    %v150 = vrot.slane %v149, 1
    %v151 = vadd.f32 %v149, %v150
    %v152 = vmul.f32 %v151, %v55
    %v153 = vadd.f32 %v152, 1e-05
    %v154 = vrsqrt.pop %v153
    %v155 = vmul.f32 %v154, %v153
    %v156 = vmul.f32 %v155, %v154
    %v157 = vmul.f32 0.5, %v156
    %v158 = vsub.f32 1.5, %v157
    %v159 = vmul.f32 %v154, %v158
    %vm160 = vweird.f32 %v153
    %vm161 = vweird.f32 %v154
    %vm162 = vmor %vm160, %vm161
    %v163 = vsel %vm162, %v154, %v159
    %v164 = vmul.f32 %v139, %v163
    %v165 = vmul.f32 %v140, %v163
    %v166 = vld [vmem:[%s3] sm:$0xff]
    %v167 = vld [vmem:[%s3 + $0x8] sm:$0xff]
    %v168 = vld [vmem:[%s3 + $0x10] sm:$0xff]
    %v169 = vld [vmem:[%s3 + $0x18] sm:$0xff]
    %v170 = vld [vmem:[%s4] sm:$0x1]
    %v172 = vperm.slane %v170, 0
    %v175 = vsel %vm128, %v164, 0
    %v178 = vsel %vm128, %v165, 0
    %180 = vmatpush.msra.mxu0 0.0
    %181 = vmatpush.msra.mxu0 0.0
    %182 = vmatpush.msra.mxu0 0.0
    %183 = vmatpush.msra.mxu0 0.0
    %184 = vmatpush.msra.mxu0 0.0
    %185 = vmatpush.msra.mxu0 0.0
    %186 = vmatpush.msra.mxu0 0.0
    %187 = vmatpush.msra.mxu0 0.0
    %188 = vmatpush.msra.mxu0 0.0
    %189 = vmatpush.msra.mxu0 0.0
    %190 = vmatpush.msra.mxu0 0.0
    %191 = vmatpush.msra.mxu0 0.0
    %192 = vmatpush.msra.mxu0 %v169
    %193 = vmatpush.msra.mxu0 %v168
    %194 = vmatpush.msra.mxu0 %v167
    %195 = vmatpush.msra.mxu0 %v166
    %196 = vmatmul.f32.gmra.mxu0 %v175
    %v197 = vpop.f32.mrf.mxu0
    %v198 = vadd.f32 %v172, %v197
    %199 = vmatmul.f32.gmra.mxu0 %v178
    %v200 = vpop.f32.mrf.mxu0
    %v201 = vadd.f32 %v172, %v200
    %202 = vdwg.mxu0
    %v203 = vld [vmem:[%s5] sm:$0xff]
    %v204 = vld [vmem:[%s5 + $0x8] sm:$0xff]
    %v205 = vld [vmem:[%s5 + $0x10] sm:$0xff]
    %v206 = vld [vmem:[%s5 + $0x18] sm:$0xff]
    %v208 = vsel %vm128, %v198, 0
    %v211 = vsel %vm128, %v201, 0
    %213 = vmatpush.msra.mxu0 0.0
    %214 = vmatpush.msra.mxu0 0.0
    %215 = vmatpush.msra.mxu0 0.0
    %216 = vmatpush.msra.mxu0 0.0
    %217 = vmatpush.msra.mxu0 0.0
    %218 = vmatpush.msra.mxu0 0.0
    %219 = vmatpush.msra.mxu0 0.0
    %220 = vmatpush.msra.mxu0 0.0
    %221 = vmatpush.msra.mxu0 0.0
    %222 = vmatpush.msra.mxu0 0.0
    %223 = vmatpush.msra.mxu0 0.0
    %224 = vmatpush.msra.mxu0 0.0
    %225 = vmatpush.msra.mxu0 %v206
    %226 = vmatpush.msra.mxu0 %v205
    %227 = vmatpush.msra.mxu0 %v204
    %228 = vmatpush.msra.mxu0 %v203
    %229 = vmatmul.f32.gmra.mxu0 %v208
    %v230 = vpop.f32.mrf.mxu0
    %v231 = vadd.f32 0.0, %v230
    %232 = vmatmul.f32.gmra.mxu0 %v211
    %v233 = vpop.f32.mrf.mxu0
    %v234 = vadd.f32 0.0, %v233
    %235 = vdwg.mxu0
    %236 = vxpose.xlu0.b32.start [1/16] %v231, 128
    %237 = vxpose.xlu0.b32.cont [2/16] %v234, 128
    %238 = vxpose.xlu0.b32.cont [3/16] 0.0, 128
    %239 = vxpose.xlu0.b32.cont [4/16] 0.0, 128
    %240 = vxpose.xlu0.b32.cont [5/16] 0.0, 128
    %241 = vxpose.xlu0.b32.cont [6/16] 0.0, 128
    %242 = vxpose.xlu0.b32.cont [7/16] 0.0, 128
    %243 = vxpose.xlu0.b32.cont [8/16] 0.0, 128
    %244 = vxpose.xlu0.b32.cont [9/16] 0.0, 128
    %245 = vxpose.xlu0.b32.cont [10/16] 0.0, 128
    %246 = vxpose.xlu0.b32.cont [11/16] 0.0, 128
    %247 = vxpose.xlu0.b32.cont [12/16] 0.0, 128
    %248 = vxpose.xlu0.b32.cont [13/16] 0.0, 128
    %249 = vxpose.xlu0.b32.cont [14/16] 0.0, 128
    %250 = vxpose.xlu0.b32.cont [15/16] 0.0, 128
    %251 = vxpose.xlu0.b32.end [16/16] 0.0, 128
    %v252 = vpop.trf.xlu0
    %v253 = vpop.trf.xlu0
    %v254 = vpop.trf.xlu0
    %v255 = vpop.trf.xlu0
    %v256 = vpop.trf.xlu0
    %v257 = vpop.trf.xlu0
    %v258 = vpop.trf.xlu0
    %v259 = vpop.trf.xlu0
    %v260 = vpop.trf.xlu0
    %v261 = vpop.trf.xlu0
    %v262 = vpop.trf.xlu0
    %v263 = vpop.trf.xlu0
    %v264 = vpop.trf.xlu0
    %v265 = vpop.trf.xlu0
    %v266 = vpop.trf.xlu0
    %v267 = vpop.trf.xlu0
    %v268 = vpack.c.bf16 %v198, %v198
    %v269 = vpack.c.bf16 %v201, %v201
    %v270 = vld [vmem:[%s6] sm:$0x1]
    %272 = vset.pattern.permute.xlu0 4
    %273 = vperm.xlu0 %272, %v231
    %v274 = vpop.permute.xlu0 %273
    %277 = vset.pattern.permute.xlu0 4
    %278 = vperm.xlu0 %277, %v234
    %v279 = vpop.permute.xlu0 %278
    %v281 = vperm.slane %v252, 0
    %v282 = vadd.f32 %v274, %v281
    %v283 = vadd.f32 %v279, %v281
    %vm284 = vcmp.gt.f32.partialorder %v282, 0.0
    %vm285 = vcmp.gt.f32.partialorder %v283, 0.0
    %v286 = vmul.f32 %v282, 0.2
    %v287 = vmul.f32 %v283, 0.2
    %v288 = vsel %vm284, %v282, %v286
    %v289 = vsel %vm285, %v283, %v287
    %v290 = vadd.f32 %v288, %v126
    %v291 = vadd.f32 %v289, %v127
    %vm292 = vcmask 130048
    %v293 = vsel %vm292, %v290, -inf
    %294 = vmax.xlane.f32.xlu0 %v293
    %v295 = vpop.xlane.xlu0 %294
    %v296 = vsel %vm292, %v291, -inf
    %297 = vmax.xlane.f32.xlu0 %v296
    %v298 = vpop.xlane.xlu0 %297
    %v299 = vsub.f32 %v290, %v295
    %v300 = vsub.f32 %v291, %v298
    %v301 = vmul.f32 %v299, 1.442695
    %v302 = vpow.pop %v301
    %v303 = vmul.f32 %v300, 1.442695
    %v304 = vpow.pop %v303
    %v305 = vsel %vm292, %v302, 0.0
    %306 = vadd.xlane.f32.xlu0 %v305
    %v307 = vpop.xlane.xlu0 %306
    %v308 = vsel %vm292, %v304, 0.0
    %309 = vadd.xlane.f32.xlu0 %v308
    %v310 = vpop.xlane.xlu0 %309
    %v311 = vpack.c.bf16 %v304, %v302
    %v314 = vunpack.c.l.b16 %v268
    %v315 = vunpack.c.l.b16 %v269
    %v316 = vpack.c.b16 %v315, %v314
    %v319 = vsel %vm292, %v311, 0
    %321 = vmatpush.bf16.msra.mxu0 0
    %322 = vmatpush.bf16.msra.mxu0 0
    %323 = vmatpush.bf16.msra.mxu0 0
    %324 = vmatpush.bf16.msra.mxu0 0
    %325 = vmatpush.bf16.msra.mxu0 0
    %326 = vmatpush.bf16.msra.mxu0 0
    %327 = vmatpush.bf16.msra.mxu0 0
    %328 = vmatpush.bf16.msra.mxu0 %v316
    %329 = vmatmul.bf16.gmra.mxu0 %v319
    %v330 = vpop.f32.mrf.mxu0
    %v331 = vadd.f32 0.0, %v330
    %v332 = vpop.f32.mrf.mxu0
    %v333 = vadd.f32 0.0, %v332
    %334 = vdwg.mxu0
    %v335 = vrcp.pop %v307
    %v336 = vrcp.pop %v310
    %v337 = vmul.f32 %v331, %v335
    %v338 = vmul.f32 %v333, %v336
    %v340 = vperm.slane %v270, 0
    %v342 = vadd.f32 %v337, %v340
    %v343 = vadd.f32 %v338, %v340
    %vm344 = vcmp.gt.f32.partialorder %v342, 0.0
    %vm345 = vcmp.gt.f32.partialorder %v343, 0.0
    %v346 = vmul.f32 %v342, 0.01
    %v347 = vmul.f32 %v343, 0.01
    %v348 = vsel %vm344, %v342, %v346
    %v349 = vsel %vm345, %v343, %v347
    %350 = vst.msk [vmem:[#allocation2] sm:$0xff] %vm39, %v348
    %351 = vst.msk [vmem:[#allocation2 + $0x8] sm:$0xff] %vm39, %v349
    %352 = vset.pattern.permute.xlu0 5
    %353 = vperm.xlu0 %352, %v231
    %v354 = vpop.permute.xlu0 %353
    %356 = vset.pattern.permute.xlu0 5
    %357 = vperm.xlu0 %356, %v234
    %v358 = vpop.permute.xlu0 %357
    %v360 = vperm.slane %v252, 1
    %v361 = vadd.f32 %v354, %v360
    %v362 = vadd.f32 %v358, %v360
    %vm363 = vcmp.gt.f32.partialorder %v361, 0.0
    %vm364 = vcmp.gt.f32.partialorder %v362, 0.0
    %v365 = vmul.f32 %v361, 0.2
    %v366 = vmul.f32 %v362, 0.2
    %v367 = vsel %vm363, %v361, %v365
    %v368 = vsel %vm364, %v362, %v366
    %v369 = vadd.f32 %v367, %v126
    %v370 = vadd.f32 %v368, %v127
    %v371 = vsel %vm292, %v369, -inf
    %372 = vmax.xlane.f32.xlu0 %v371
    %v373 = vpop.xlane.xlu0 %372
    %v374 = vsel %vm292, %v370, -inf
    %375 = vmax.xlane.f32.xlu0 %v374
    %v376 = vpop.xlane.xlu0 %375
    %v377 = vsub.f32 %v369, %v373
    %v378 = vsub.f32 %v370, %v376
    %v379 = vmul.f32 %v377, 1.442695
    %v380 = vpow.pop %v379
    %v381 = vmul.f32 %v378, 1.442695
    %v382 = vpow.pop %v381
    %v383 = vsel %vm292, %v380, 0.0
    %384 = vadd.xlane.f32.xlu0 %v383
    %v385 = vpop.xlane.xlu0 %384
    %v386 = vsel %vm292, %v382, 0.0
    %387 = vadd.xlane.f32.xlu0 %v386
    %v388 = vpop.xlane.xlu0 %387
    %v389 = vpack.c.bf16 %v382, %v380
    %390 = vrot.lane.b32.xlu0 %v316, 120
    %v391 = vpop.permute.xlu0 %390
    %v394 = vsel %vm292, %v389, 0
    %396 = vmatpush.bf16.msra.mxu0 0
    %397 = vmatpush.bf16.msra.mxu0 0
    %398 = vmatpush.bf16.msra.mxu0 0
    %399 = vmatpush.bf16.msra.mxu0 0
    %400 = vmatpush.bf16.msra.mxu0 0
    %401 = vmatpush.bf16.msra.mxu0 0
    %402 = vmatpush.bf16.msra.mxu0 0
    %403 = vmatpush.bf16.msra.mxu0 %v391
    %404 = vmatmul.bf16.gmra.mxu0 %v394
    %v405 = vpop.f32.mrf.mxu0
    %v406 = vadd.f32 0.0, %v405
    %v407 = vpop.f32.mrf.mxu0
    %v408 = vadd.f32 0.0, %v407
    %409 = vdwg.mxu0
    %v410 = vrcp.pop %v385
    %v411 = vrcp.pop %v388
    %v412 = vmul.f32 %v406, %v410
    %v413 = vmul.f32 %v408, %v411
    %414 = vrot.lane.b32.xlu0 %v340, 120
    %v415 = vpop.permute.xlu0 %414
    %v417 = vadd.f32 %v412, %v415
    %v418 = vadd.f32 %v413, %v415
    %vm419 = vcmp.gt.f32.partialorder %v417, 0.0
    %vm420 = vcmp.gt.f32.partialorder %v418, 0.0
    %v421 = vmul.f32 %v417, 0.01
    %v422 = vmul.f32 %v418, 0.01
    %v423 = vsel %vm419, %v417, %v421
    %v424 = vsel %vm420, %v418, %v422
    %427 = vrot.lane.b32.xlu0 %v423, 8
    %v428 = vpop.permute.xlu0 %427
    %429 = vrot.lane.b32.xlu0 %v424, 8
    %v430 = vpop.permute.xlu0 %429
    %vm433 = vcmask 130112
    %434 = vst.msk [vmem:[#allocation2] sm:$0xff] %vm433, %v428
    %435 = vst.msk [vmem:[#allocation2 + $0x8] sm:$0xff] %vm433, %v430
    %436 = vset.pattern.permute.xlu0 6
    %437 = vperm.xlu0 %436, %v231
    %v438 = vpop.permute.xlu0 %437
    %440 = vset.pattern.permute.xlu0 6
    %441 = vperm.xlu0 %440, %v234
    %v442 = vpop.permute.xlu0 %441
    %v444 = vperm.slane %v252, 2
    %v445 = vadd.f32 %v438, %v444
    %v446 = vadd.f32 %v442, %v444
    %vm447 = vcmp.gt.f32.partialorder %v445, 0.0
    %vm448 = vcmp.gt.f32.partialorder %v446, 0.0
    %v449 = vmul.f32 %v445, 0.2
    %v450 = vmul.f32 %v446, 0.2
    %v451 = vsel %vm447, %v445, %v449
    %v452 = vsel %vm448, %v446, %v450
    %v453 = vadd.f32 %v451, %v126
    %v454 = vadd.f32 %v452, %v127
    %v455 = vsel %vm292, %v453, -inf
    %456 = vmax.xlane.f32.xlu0 %v455
    %v457 = vpop.xlane.xlu0 %456
    %v458 = vsel %vm292, %v454, -inf
    %459 = vmax.xlane.f32.xlu0 %v458
    %v460 = vpop.xlane.xlu0 %459
    %v461 = vsub.f32 %v453, %v457
    %v462 = vsub.f32 %v454, %v460
    %v463 = vmul.f32 %v461, 1.442695
    %v464 = vpow.pop %v463
    %v465 = vmul.f32 %v462, 1.442695
    %v466 = vpow.pop %v465
    %v467 = vsel %vm292, %v464, 0.0
    %468 = vadd.xlane.f32.xlu0 %v467
    %v469 = vpop.xlane.xlu0 %468
    %v470 = vsel %vm292, %v466, 0.0
    %471 = vadd.xlane.f32.xlu0 %v470
    %v472 = vpop.xlane.xlu0 %471
    %v473 = vpack.c.bf16 %v466, %v464
    %474 = vrot.lane.b32.xlu0 %v316, 112
    %v475 = vpop.permute.xlu0 %474
    %v478 = vsel %vm292, %v473, 0
    %480 = vmatpush.bf16.msra.mxu0 0
    %481 = vmatpush.bf16.msra.mxu0 0
    %482 = vmatpush.bf16.msra.mxu0 0
    %483 = vmatpush.bf16.msra.mxu0 0
    %484 = vmatpush.bf16.msra.mxu0 0
    %485 = vmatpush.bf16.msra.mxu0 0
    %486 = vmatpush.bf16.msra.mxu0 0
    %487 = vmatpush.bf16.msra.mxu0 %v475
    %488 = vmatmul.bf16.gmra.mxu0 %v478
    %v489 = vpop.f32.mrf.mxu0
    %v490 = vadd.f32 0.0, %v489
    %v491 = vpop.f32.mrf.mxu0
    %v492 = vadd.f32 0.0, %v491
    %493 = vdwg.mxu0
    %v494 = vrcp.pop %v469
    %v495 = vrcp.pop %v472
    %v496 = vmul.f32 %v490, %v494
    %v497 = vmul.f32 %v492, %v495
    %498 = vrot.lane.b32.xlu0 %v340, 112
    %v499 = vpop.permute.xlu0 %498
    %v501 = vadd.f32 %v496, %v499
    %v502 = vadd.f32 %v497, %v499
    %vm503 = vcmp.gt.f32.partialorder %v501, 0.0
    %vm504 = vcmp.gt.f32.partialorder %v502, 0.0
    %v505 = vmul.f32 %v501, 0.01
    %v506 = vmul.f32 %v502, 0.01
    %v507 = vsel %vm503, %v501, %v505
    %v508 = vsel %vm504, %v502, %v506
    %511 = vrot.lane.b32.xlu0 %v507, 16
    %v512 = vpop.permute.xlu0 %511
    %513 = vrot.lane.b32.xlu0 %v508, 16
    %v514 = vpop.permute.xlu0 %513
    %vm517 = vcmask 195712
    %518 = vst.msk [vmem:[#allocation2] sm:$0xff] %vm517, %v512
    %519 = vst.msk [vmem:[#allocation2 + $0x8] sm:$0xff] %vm517, %v514
    %520 = vset.pattern.permute.xlu0 7
    %521 = vperm.xlu0 %520, %v231
    %v522 = vpop.permute.xlu0 %521
    %524 = vset.pattern.permute.xlu0 7
    %525 = vperm.xlu0 %524, %v234
    %v526 = vpop.permute.xlu0 %525
    %v528 = vperm.slane %v252, 3
    %v529 = vadd.f32 %v522, %v528
    %v530 = vadd.f32 %v526, %v528
    %vm531 = vcmp.gt.f32.partialorder %v529, 0.0
    %vm532 = vcmp.gt.f32.partialorder %v530, 0.0
    %v533 = vmul.f32 %v529, 0.2
    %v534 = vmul.f32 %v530, 0.2
    %v535 = vsel %vm531, %v529, %v533
    %v536 = vsel %vm532, %v530, %v534
    %v537 = vadd.f32 %v535, %v126
    %v538 = vadd.f32 %v536, %v127
    %v539 = vsel %vm292, %v537, -inf
    %540 = vmax.xlane.f32.xlu0 %v539
    %v541 = vpop.xlane.xlu0 %540
    %v542 = vsel %vm292, %v538, -inf
    %543 = vmax.xlane.f32.xlu0 %v542
    %v544 = vpop.xlane.xlu0 %543
    %v545 = vsub.f32 %v537, %v541
    %v546 = vsub.f32 %v538, %v544
    %v547 = vmul.f32 %v545, 1.442695
    %v548 = vpow.pop %v547
    %v549 = vmul.f32 %v546, 1.442695
    %v550 = vpow.pop %v549
    %v551 = vsel %vm292, %v548, 0.0
    %552 = vadd.xlane.f32.xlu0 %v551
    %v553 = vpop.xlane.xlu0 %552
    %v554 = vsel %vm292, %v550, 0.0
    %555 = vadd.xlane.f32.xlu0 %v554
    %v556 = vpop.xlane.xlu0 %555
    %v557 = vpack.c.bf16 %v550, %v548
    %558 = vrot.lane.b32.xlu0 %v316, 104
    %v559 = vpop.permute.xlu0 %558
    %v562 = vsel %vm292, %v557, 0
    %564 = vmatpush.bf16.msra.mxu0 0
    %565 = vmatpush.bf16.msra.mxu0 0
    %566 = vmatpush.bf16.msra.mxu0 0
    %567 = vmatpush.bf16.msra.mxu0 0
    %568 = vmatpush.bf16.msra.mxu0 0
    %569 = vmatpush.bf16.msra.mxu0 0
    %570 = vmatpush.bf16.msra.mxu0 0
    %571 = vmatpush.bf16.msra.mxu0 %v559
    %572 = vmatmul.bf16.gmra.mxu0 %v562
    %v573 = vpop.f32.mrf.mxu0
    %v574 = vadd.f32 0.0, %v573
    %v575 = vpop.f32.mrf.mxu0
    %v576 = vadd.f32 0.0, %v575
    %577 = vdwg.mxu0
    %v578 = vrcp.pop %v553
    %v579 = vrcp.pop %v556
    %v580 = vmul.f32 %v574, %v578
    %v581 = vmul.f32 %v576, %v579
    %582 = vrot.lane.b32.xlu0 %v340, 104
    %v583 = vpop.permute.xlu0 %582
    %v585 = vadd.f32 %v580, %v583
    %v586 = vadd.f32 %v581, %v583
    %vm587 = vcmp.gt.f32.partialorder %v585, 0.0
    %vm588 = vcmp.gt.f32.partialorder %v586, 0.0
    %v589 = vmul.f32 %v585, 0.01
    %v590 = vmul.f32 %v586, 0.01
    %v591 = vsel %vm587, %v585, %v589
    %v592 = vsel %vm588, %v586, %v590
    %595 = vrot.lane.b32.xlu0 %v591, 24
    %v596 = vpop.permute.xlu0 %595
    %597 = vrot.lane.b32.xlu0 %v592, 24
    %v598 = vpop.permute.xlu0 %597
    %vm601 = vcmask 261312
    %602 = vst.msk [vmem:[#allocation2] sm:$0xff] %vm601, %v596
    %603 = vst.msk [vmem:[#allocation2 + $0x8] sm:$0xff] %vm601, %v598
    %v604 = vld [vmem:[#allocation2] sm:$0xff]
    %v605 = vld [vmem:[#allocation2 + $0x8] sm:$0xff]
    %v606 = vsel %vm128, %v604, 0.0
    %v607 = vsel %vm128, %v605, 0.0
    %v608 = vadd.f32 %v606, %v607
    %v609 = vrot.slane %v608, 4
    %v610 = vadd.f32 %v608, %v609
    %v611 = vrot.slane %v610, 2
    %v612 = vadd.f32 %v610, %v611
    %v613 = vrot.slane %v612, 1
    %v614 = vadd.f32 %v612, %v613
    %v615 = vmul.f32 %v614, %v55
    %v616 = vsub.f32 %v604, %v615
    %v617 = vsub.f32 %v605, %v615
    %v618 = vmul.f32 %v616, %v616
    %v619 = vmul.f32 %v617, %v617
    %v620 = vsel %vm128, %v618, 0.0
    %v621 = vsel %vm128, %v619, 0.0
    %v622 = vadd.f32 %v620, %v621
    %v623 = vrot.slane %v622, 4
    %v624 = vadd.f32 %v622, %v623
    %v625 = vrot.slane %v624, 2
    %v626 = vadd.f32 %v624, %v625
    %v627 = vrot.slane %v626, 1
    %v628 = vadd.f32 %v626, %v627
    %v629 = vmul.f32 %v628, %v55
    %v630 = vadd.f32 %v629, 1e-05
    %v631 = vrsqrt.pop %v630
    %v632 = vmul.f32 %v631, %v630
    %v633 = vmul.f32 %v632, %v631
    %v634 = vmul.f32 0.5, %v633
    %v635 = vsub.f32 1.5, %v634
    %v636 = vmul.f32 %v631, %v635
    %vm637 = vweird.f32 %v630
    %vm638 = vweird.f32 %v631
    %vm639 = vmor %vm637, %vm638
    %v640 = vsel %vm639, %v631, %v636
    %v641 = vmul.f32 %v616, %v640
    %v642 = vmul.f32 %v617, %v640
    %s643 = scalar_lea.vmem %s3, 32
    %v644 = vld [vmem:[%s643] sm:$0xff]
    %v645 = vld [vmem:[%s643 + $0x8] sm:$0xff]
    %v646 = vld [vmem:[%s643 + $0x10] sm:$0xff]
    %v647 = vld [vmem:[%s643 + $0x18] sm:$0xff]
    %s648 = scalar_lea.vmem %s4, 1
    %v649 = vld [vmem:[%s648] sm:$0x1]
    %v651 = vperm.slane %v649, 0
    %v654 = vsel %vm128, %v641, 0
    %v657 = vsel %vm128, %v642, 0
    %659 = vmatpush.msra.mxu0 0.0
    %660 = vmatpush.msra.mxu0 0.0
    %661 = vmatpush.msra.mxu0 0.0
    %662 = vmatpush.msra.mxu0 0.0
    %663 = vmatpush.msra.mxu0 0.0
    %664 = vmatpush.msra.mxu0 0.0
    %665 = vmatpush.msra.mxu0 0.0
    %666 = vmatpush.msra.mxu0 0.0
    %667 = vmatpush.msra.mxu0 0.0
    %668 = vmatpush.msra.mxu0 0.0
    %669 = vmatpush.msra.mxu0 0.0
    %670 = vmatpush.msra.mxu0 0.0
    %671 = vmatpush.msra.mxu0 %v647
    %672 = vmatpush.msra.mxu0 %v646
    %673 = vmatpush.msra.mxu0 %v645
    %674 = vmatpush.msra.mxu0 %v644
    %675 = vmatmul.f32.gmra.mxu0 %v654
    %v676 = vpop.f32.mrf.mxu0
    %v677 = vadd.f32 %v651, %v676
    %678 = vmatmul.f32.gmra.mxu0 %v657
    %v679 = vpop.f32.mrf.mxu0
    %v680 = vadd.f32 %v651, %v679
    %681 = vdwg.mxu0
    %s682 = scalar_lea.vmem %s5, 32
    %v683 = vld [vmem:[%s682] sm:$0xff]
    %v684 = vld [vmem:[%s682 + $0x8] sm:$0xff]
    %v685 = vld [vmem:[%s682 + $0x10] sm:$0xff]
    %v686 = vld [vmem:[%s682 + $0x18] sm:$0xff]
    %v688 = vsel %vm128, %v677, 0
    %v691 = vsel %vm128, %v680, 0
    %693 = vmatpush.msra.mxu0 0.0
    %694 = vmatpush.msra.mxu0 0.0
    %695 = vmatpush.msra.mxu0 0.0
    %696 = vmatpush.msra.mxu0 0.0
    %697 = vmatpush.msra.mxu0 0.0
    %698 = vmatpush.msra.mxu0 0.0
    %699 = vmatpush.msra.mxu0 0.0
    %700 = vmatpush.msra.mxu0 0.0
    %701 = vmatpush.msra.mxu0 0.0
    %702 = vmatpush.msra.mxu0 0.0
    %703 = vmatpush.msra.mxu0 0.0
    %704 = vmatpush.msra.mxu0 0.0
    %705 = vmatpush.msra.mxu0 %v686
    %706 = vmatpush.msra.mxu0 %v685
    %707 = vmatpush.msra.mxu0 %v684
    %708 = vmatpush.msra.mxu0 %v683
    %709 = vmatmul.f32.gmra.mxu0 %v688
    %v710 = vpop.f32.mrf.mxu0
    %v711 = vadd.f32 0.0, %v710
    %712 = vmatmul.f32.gmra.mxu0 %v691
    %v713 = vpop.f32.mrf.mxu0
    %v714 = vadd.f32 0.0, %v713
    %715 = vdwg.mxu0
    %716 = vxpose.xlu0.b32.start [1/16] %v711, 128
    %717 = vxpose.xlu0.b32.cont [2/16] %v714, 128
    %718 = vxpose.xlu0.b32.cont [3/16] 0.0, 128
    %719 = vxpose.xlu0.b32.cont [4/16] 0.0, 128
    %720 = vxpose.xlu0.b32.cont [5/16] 0.0, 128
    %721 = vxpose.xlu0.b32.cont [6/16] 0.0, 128
    %722 = vxpose.xlu0.b32.cont [7/16] 0.0, 128
    %723 = vxpose.xlu0.b32.cont [8/16] 0.0, 128
    %724 = vxpose.xlu0.b32.cont [9/16] 0.0, 128
    %725 = vxpose.xlu0.b32.cont [10/16] 0.0, 128
    %726 = vxpose.xlu0.b32.cont [11/16] 0.0, 128
    %727 = vxpose.xlu0.b32.cont [12/16] 0.0, 128
    %728 = vxpose.xlu0.b32.cont [13/16] 0.0, 128
    %729 = vxpose.xlu0.b32.cont [14/16] 0.0, 128
    %730 = vxpose.xlu0.b32.cont [15/16] 0.0, 128
    %731 = vxpose.xlu0.b32.end [16/16] 0.0, 128
    %v732 = vpop.trf.xlu0
    %v733 = vpop.trf.xlu0
    %v734 = vpop.trf.xlu0
    %v735 = vpop.trf.xlu0
    %v736 = vpop.trf.xlu0
    %v737 = vpop.trf.xlu0
    %v738 = vpop.trf.xlu0
    %v739 = vpop.trf.xlu0
    %v740 = vpop.trf.xlu0
    %v741 = vpop.trf.xlu0
    %v742 = vpop.trf.xlu0
    %v743 = vpop.trf.xlu0
    %v744 = vpop.trf.xlu0
    %v745 = vpop.trf.xlu0
    %v746 = vpop.trf.xlu0
    %v747 = vpop.trf.xlu0
    %v748 = vpack.c.bf16 %v677, %v677
    %v749 = vpack.c.bf16 %v680, %v680
    %s750 = scalar_lea.vmem %s6, 1
    %v751 = vld [vmem:[%s750] sm:$0x1]
    %753 = vset.pattern.permute.xlu0 4
    %754 = vperm.xlu0 %753, %v711
    %v755 = vpop.permute.xlu0 %754
    %758 = vset.pattern.permute.xlu0 4
    %759 = vperm.xlu0 %758, %v714
    %v760 = vpop.permute.xlu0 %759
    %v762 = vperm.slane %v732, 0
    %v763 = vadd.f32 %v755, %v762
    %v764 = vadd.f32 %v760, %v762
    %vm765 = vcmp.gt.f32.partialorder %v763, 0.0
    %vm766 = vcmp.gt.f32.partialorder %v764, 0.0
    %v767 = vmul.f32 %v763, 0.2
    %v768 = vmul.f32 %v764, 0.2
    %v769 = vsel %vm765, %v763, %v767
    %v770 = vsel %vm766, %v764, %v768
    %v771 = vadd.f32 %v769, %v126
    %v772 = vadd.f32 %v770, %v127
    %v773 = vsel %vm292, %v771, -inf
    %774 = vmax.xlane.f32.xlu0 %v773
    %v775 = vpop.xlane.xlu0 %774
    %v776 = vsel %vm292, %v772, -inf
    %777 = vmax.xlane.f32.xlu0 %v776
    %v778 = vpop.xlane.xlu0 %777
    %v779 = vsub.f32 %v771, %v775
    %v780 = vsub.f32 %v772, %v778
    %v781 = vmul.f32 %v779, 1.442695
    %v782 = vpow.pop %v781
    %v783 = vmul.f32 %v780, 1.442695
    %v784 = vpow.pop %v783
    %v785 = vsel %vm292, %v782, 0.0
    %786 = vadd.xlane.f32.xlu0 %v785
    %v787 = vpop.xlane.xlu0 %786
    %v788 = vsel %vm292, %v784, 0.0
    %789 = vadd.xlane.f32.xlu0 %v788
    %v790 = vpop.xlane.xlu0 %789
    %v791 = vpack.c.bf16 %v784, %v782
    %v794 = vunpack.c.l.b16 %v748
    %v795 = vunpack.c.l.b16 %v749
    %v796 = vpack.c.b16 %v795, %v794
    %v799 = vsel %vm292, %v791, 0
    %801 = vmatpush.bf16.msra.mxu0 0
    %802 = vmatpush.bf16.msra.mxu0 0
    %803 = vmatpush.bf16.msra.mxu0 0
    %804 = vmatpush.bf16.msra.mxu0 0
    %805 = vmatpush.bf16.msra.mxu0 0
    %806 = vmatpush.bf16.msra.mxu0 0
    %807 = vmatpush.bf16.msra.mxu0 0
    %808 = vmatpush.bf16.msra.mxu0 %v796
    %809 = vmatmul.bf16.gmra.mxu0 %v799
    %v810 = vpop.f32.mrf.mxu0
    %v811 = vadd.f32 0.0, %v810
    %v812 = vpop.f32.mrf.mxu0
    %v813 = vadd.f32 0.0, %v812
    %814 = vdwg.mxu0
    %v815 = vrcp.pop %v787
    %v816 = vrcp.pop %v790
    %v817 = vmul.f32 %v811, %v815
    %v818 = vmul.f32 %v813, %v816
    %v820 = vperm.slane %v751, 0
    %v822 = vadd.f32 %v817, %v820
    %v823 = vadd.f32 %v818, %v820
    %vm824 = vcmp.gt.f32.partialorder %v822, 0.0
    %vm825 = vcmp.gt.f32.partialorder %v823, 0.0
    %v826 = vmul.f32 %v822, 0.01
    %v827 = vmul.f32 %v823, 0.01
    %v828 = vsel %vm824, %v822, %v826
    %v829 = vsel %vm825, %v823, %v827
    %830 = vst.msk [vmem:[#allocation2] sm:$0xff] %vm39, %v828
    %831 = vst.msk [vmem:[#allocation2 + $0x8] sm:$0xff] %vm39, %v829
    %832 = vset.pattern.permute.xlu0 5
    %833 = vperm.xlu0 %832, %v711
    %v834 = vpop.permute.xlu0 %833
    %836 = vset.pattern.permute.xlu0 5
    %837 = vperm.xlu0 %836, %v714
    %v838 = vpop.permute.xlu0 %837
    %v840 = vperm.slane %v732, 1
    %v841 = vadd.f32 %v834, %v840
    %v842 = vadd.f32 %v838, %v840
    %vm843 = vcmp.gt.f32.partialorder %v841, 0.0
    %vm844 = vcmp.gt.f32.partialorder %v842, 0.0
    %v845 = vmul.f32 %v841, 0.2
    %v846 = vmul.f32 %v842, 0.2
    %v847 = vsel %vm843, %v841, %v845
    %v848 = vsel %vm844, %v842, %v846
    %v849 = vadd.f32 %v847, %v126
    %v850 = vadd.f32 %v848, %v127
    %v851 = vsel %vm292, %v849, -inf
    %852 = vmax.xlane.f32.xlu0 %v851
    %v853 = vpop.xlane.xlu0 %852
    %v854 = vsel %vm292, %v850, -inf
    %855 = vmax.xlane.f32.xlu0 %v854
    %v856 = vpop.xlane.xlu0 %855
    %v857 = vsub.f32 %v849, %v853
    %v858 = vsub.f32 %v850, %v856
    %v859 = vmul.f32 %v857, 1.442695
    %v860 = vpow.pop %v859
    %v861 = vmul.f32 %v858, 1.442695
    %v862 = vpow.pop %v861
    %v863 = vsel %vm292, %v860, 0.0
    %864 = vadd.xlane.f32.xlu0 %v863
    %v865 = vpop.xlane.xlu0 %864
    %v866 = vsel %vm292, %v862, 0.0
    %867 = vadd.xlane.f32.xlu0 %v866
    %v868 = vpop.xlane.xlu0 %867
    %v869 = vpack.c.bf16 %v862, %v860
    %870 = vrot.lane.b32.xlu0 %v796, 120
    %v871 = vpop.permute.xlu0 %870
    %v874 = vsel %vm292, %v869, 0
    %876 = vmatpush.bf16.msra.mxu0 0
    %877 = vmatpush.bf16.msra.mxu0 0
    %878 = vmatpush.bf16.msra.mxu0 0
    %879 = vmatpush.bf16.msra.mxu0 0
    %880 = vmatpush.bf16.msra.mxu0 0
    %881 = vmatpush.bf16.msra.mxu0 0
    %882 = vmatpush.bf16.msra.mxu0 0
    %883 = vmatpush.bf16.msra.mxu0 %v871
    %884 = vmatmul.bf16.gmra.mxu0 %v874
    %v885 = vpop.f32.mrf.mxu0
    %v886 = vadd.f32 0.0, %v885
    %v887 = vpop.f32.mrf.mxu0
    %v888 = vadd.f32 0.0, %v887
    %889 = vdwg.mxu0
    %v890 = vrcp.pop %v865
    %v891 = vrcp.pop %v868
    %v892 = vmul.f32 %v886, %v890
    %v893 = vmul.f32 %v888, %v891
    %894 = vrot.lane.b32.xlu0 %v820, 120
    %v895 = vpop.permute.xlu0 %894
    %v897 = vadd.f32 %v892, %v895
    %v898 = vadd.f32 %v893, %v895
    %vm899 = vcmp.gt.f32.partialorder %v897, 0.0
    %vm900 = vcmp.gt.f32.partialorder %v898, 0.0
    %v901 = vmul.f32 %v897, 0.01
    %v902 = vmul.f32 %v898, 0.01
    %v903 = vsel %vm899, %v897, %v901
    %v904 = vsel %vm900, %v898, %v902
    %907 = vrot.lane.b32.xlu0 %v903, 8
    %v908 = vpop.permute.xlu0 %907
    %909 = vrot.lane.b32.xlu0 %v904, 8
    %v910 = vpop.permute.xlu0 %909
    %913 = vst.msk [vmem:[#allocation2] sm:$0xff] %vm433, %v908
    %914 = vst.msk [vmem:[#allocation2 + $0x8] sm:$0xff] %vm433, %v910
    %915 = vset.pattern.permute.xlu0 6
    %916 = vperm.xlu0 %915, %v711
    %v917 = vpop.permute.xlu0 %916
    %919 = vset.pattern.permute.xlu0 6
    %920 = vperm.xlu0 %919, %v714
    %v921 = vpop.permute.xlu0 %920
    %v923 = vperm.slane %v732, 2
    %v924 = vadd.f32 %v917, %v923
    %v925 = vadd.f32 %v921, %v923
    %vm926 = vcmp.gt.f32.partialorder %v924, 0.0
    %vm927 = vcmp.gt.f32.partialorder %v925, 0.0
    %v928 = vmul.f32 %v924, 0.2
    %v929 = vmul.f32 %v925, 0.2
    %v930 = vsel %vm926, %v924, %v928
    %v931 = vsel %vm927, %v925, %v929
    %v932 = vadd.f32 %v930, %v126
    %v933 = vadd.f32 %v931, %v127
    %v934 = vsel %vm292, %v932, -inf
    %935 = vmax.xlane.f32.xlu0 %v934
    %v936 = vpop.xlane.xlu0 %935
    %v937 = vsel %vm292, %v933, -inf
    %938 = vmax.xlane.f32.xlu0 %v937
    %v939 = vpop.xlane.xlu0 %938
    %v940 = vsub.f32 %v932, %v936
    %v941 = vsub.f32 %v933, %v939
    %v942 = vmul.f32 %v940, 1.442695
    %v943 = vpow.pop %v942
    %v944 = vmul.f32 %v941, 1.442695
    %v945 = vpow.pop %v944
    %v946 = vsel %vm292, %v943, 0.0
    %947 = vadd.xlane.f32.xlu0 %v946
    %v948 = vpop.xlane.xlu0 %947
    %v949 = vsel %vm292, %v945, 0.0
    %950 = vadd.xlane.f32.xlu0 %v949
    %v951 = vpop.xlane.xlu0 %950
    %v952 = vpack.c.bf16 %v945, %v943
    %953 = vrot.lane.b32.xlu0 %v796, 112
    %v954 = vpop.permute.xlu0 %953
    %v957 = vsel %vm292, %v952, 0
    %959 = vmatpush.bf16.msra.mxu0 0
    %960 = vmatpush.bf16.msra.mxu0 0
    %961 = vmatpush.bf16.msra.mxu0 0
    %962 = vmatpush.bf16.msra.mxu0 0
    %963 = vmatpush.bf16.msra.mxu0 0
    %964 = vmatpush.bf16.msra.mxu0 0
    %965 = vmatpush.bf16.msra.mxu0 0
    %966 = vmatpush.bf16.msra.mxu0 %v954
    %967 = vmatmul.bf16.gmra.mxu0 %v957
    %v968 = vpop.f32.mrf.mxu0
    %v969 = vadd.f32 0.0, %v968
    %v970 = vpop.f32.mrf.mxu0
    %v971 = vadd.f32 0.0, %v970
    %972 = vdwg.mxu0
    %v973 = vrcp.pop %v948
    %v974 = vrcp.pop %v951
    %v975 = vmul.f32 %v969, %v973
    %v976 = vmul.f32 %v971, %v974
    %977 = vrot.lane.b32.xlu0 %v820, 112
    %v978 = vpop.permute.xlu0 %977
    %v980 = vadd.f32 %v975, %v978
    %v981 = vadd.f32 %v976, %v978
    %vm982 = vcmp.gt.f32.partialorder %v980, 0.0
    %vm983 = vcmp.gt.f32.partialorder %v981, 0.0
    %v984 = vmul.f32 %v980, 0.01
    %v985 = vmul.f32 %v981, 0.01
    %v986 = vsel %vm982, %v980, %v984
    %v987 = vsel %vm983, %v981, %v985
    %990 = vrot.lane.b32.xlu0 %v986, 16
    %v991 = vpop.permute.xlu0 %990
    %992 = vrot.lane.b32.xlu0 %v987, 16
    %v993 = vpop.permute.xlu0 %992
    %996 = vst.msk [vmem:[#allocation2] sm:$0xff] %vm517, %v991
    %997 = vst.msk [vmem:[#allocation2 + $0x8] sm:$0xff] %vm517, %v993
    %998 = vset.pattern.permute.xlu0 7
    %999 = vperm.xlu0 %998, %v711
    %v1000 = vpop.permute.xlu0 %999
    %1002 = vset.pattern.permute.xlu0 7
    %1003 = vperm.xlu0 %1002, %v714
    %v1004 = vpop.permute.xlu0 %1003
    %v1006 = vperm.slane %v732, 3
    %v1007 = vadd.f32 %v1000, %v1006
    %v1008 = vadd.f32 %v1004, %v1006
    %vm1009 = vcmp.gt.f32.partialorder %v1007, 0.0
    %vm1010 = vcmp.gt.f32.partialorder %v1008, 0.0
    %v1011 = vmul.f32 %v1007, 0.2
    %v1012 = vmul.f32 %v1008, 0.2
    %v1013 = vsel %vm1009, %v1007, %v1011
    %v1014 = vsel %vm1010, %v1008, %v1012
    %v1015 = vadd.f32 %v1013, %v126
    %v1016 = vadd.f32 %v1014, %v127
    %v1017 = vsel %vm292, %v1015, -inf
    %1018 = vmax.xlane.f32.xlu0 %v1017
    %v1019 = vpop.xlane.xlu0 %1018
    %v1020 = vsel %vm292, %v1016, -inf
    %1021 = vmax.xlane.f32.xlu0 %v1020
    %v1022 = vpop.xlane.xlu0 %1021
    %v1023 = vsub.f32 %v1015, %v1019
    %v1024 = vsub.f32 %v1016, %v1022
    %v1025 = vmul.f32 %v1023, 1.442695
    %v1026 = vpow.pop %v1025
    %v1027 = vmul.f32 %v1024, 1.442695
    %v1028 = vpow.pop %v1027
    %v1029 = vsel %vm292, %v1026, 0.0
    %1030 = vadd.xlane.f32.xlu0 %v1029
    %v1031 = vpop.xlane.xlu0 %1030
    %v1032 = vsel %vm292, %v1028, 0.0
    %1033 = vadd.xlane.f32.xlu0 %v1032
    %v1034 = vpop.xlane.xlu0 %1033
    %v1035 = vpack.c.bf16 %v1028, %v1026
    %1036 = vrot.lane.b32.xlu0 %v796, 104
    %v1037 = vpop.permute.xlu0 %1036
    %v1040 = vsel %vm292, %v1035, 0
    %1042 = vmatpush.bf16.msra.mxu0 0
    %1043 = vmatpush.bf16.msra.mxu0 0
    %1044 = vmatpush.bf16.msra.mxu0 0
    %1045 = vmatpush.bf16.msra.mxu0 0
    %1046 = vmatpush.bf16.msra.mxu0 0
    %1047 = vmatpush.bf16.msra.mxu0 0
    %1048 = vmatpush.bf16.msra.mxu0 0
    %1049 = vmatpush.bf16.msra.mxu0 %v1037
    %1050 = vmatmul.bf16.gmra.mxu0 %v1040
    %v1051 = vpop.f32.mrf.mxu0
    %v1052 = vadd.f32 0.0, %v1051
    %v1053 = vpop.f32.mrf.mxu0
    %v1054 = vadd.f32 0.0, %v1053
    %1055 = vdwg.mxu0
    %v1056 = vrcp.pop %v1031
    %v1057 = vrcp.pop %v1034
    %v1058 = vmul.f32 %v1052, %v1056
    %v1059 = vmul.f32 %v1054, %v1057
    %1060 = vrot.lane.b32.xlu0 %v820, 104
    %v1061 = vpop.permute.xlu0 %1060
    %v1063 = vadd.f32 %v1058, %v1061
    %v1064 = vadd.f32 %v1059, %v1061
    %vm1065 = vcmp.gt.f32.partialorder %v1063, 0.0
    %vm1066 = vcmp.gt.f32.partialorder %v1064, 0.0
    %v1067 = vmul.f32 %v1063, 0.01
    %v1068 = vmul.f32 %v1064, 0.01
    %v1069 = vsel %vm1065, %v1063, %v1067
    %v1070 = vsel %vm1066, %v1064, %v1068
    %1073 = vrot.lane.b32.xlu0 %v1069, 24
    %v1074 = vpop.permute.xlu0 %1073
    %1075 = vrot.lane.b32.xlu0 %v1070, 24
    %v1076 = vpop.permute.xlu0 %1075
    %1079 = vst.msk [vmem:[#allocation2] sm:$0xff] %vm601, %v1074
    %1080 = vst.msk [vmem:[#allocation2 + $0x8] sm:$0xff] %vm601, %v1076
    %v1081 = vld [vmem:[#allocation2] sm:$0xff]
    %v1082 = vld [vmem:[#allocation2 + $0x8] sm:$0xff]
    %v1083 = vsel %vm128, %v1081, 0.0
    %v1084 = vsel %vm128, %v1082, 0.0
    %v1085 = vadd.f32 %v1083, %v1084
    %v1086 = vrot.slane %v1085, 4
    %v1087 = vadd.f32 %v1085, %v1086
    %v1088 = vrot.slane %v1087, 2
    %v1089 = vadd.f32 %v1087, %v1088
    %v1090 = vrot.slane %v1089, 1
    %v1091 = vadd.f32 %v1089, %v1090
    %v1092 = vmul.f32 %v1091, %v55
    %v1093 = vsub.f32 %v1081, %v1092
    %v1094 = vsub.f32 %v1082, %v1092
    %v1095 = vmul.f32 %v1093, %v1093
    %v1096 = vmul.f32 %v1094, %v1094
    %v1097 = vsel %vm128, %v1095, 0.0
    %v1098 = vsel %vm128, %v1096, 0.0
    %v1099 = vadd.f32 %v1097, %v1098
    %v1100 = vrot.slane %v1099, 4
    %v1101 = vadd.f32 %v1099, %v1100
    %v1102 = vrot.slane %v1101, 2
    %v1103 = vadd.f32 %v1101, %v1102
    %v1104 = vrot.slane %v1103, 1
    %v1105 = vadd.f32 %v1103, %v1104
    %v1106 = vmul.f32 %v1105, %v55
    %v1107 = vadd.f32 %v1106, 1e-05
    %v1108 = vrsqrt.pop %v1107
    %v1109 = vmul.f32 %v1108, %v1107
    %v1110 = vmul.f32 %v1109, %v1108
    %v1111 = vmul.f32 0.5, %v1110
    %v1112 = vsub.f32 1.5, %v1111
    %v1113 = vmul.f32 %v1108, %v1112
    %vm1114 = vweird.f32 %v1107
    %vm1115 = vweird.f32 %v1108
    %vm1116 = vmor %vm1114, %vm1115
    %v1117 = vsel %vm1116, %v1108, %v1113
    %v1118 = vmul.f32 %v1093, %v1117
    %v1119 = vmul.f32 %v1094, %v1117
    %s1120 = scalar_lea.vmem %s3, 64
    %v1121 = vld [vmem:[%s1120] sm:$0xff]
    %v1122 = vld [vmem:[%s1120 + $0x8] sm:$0xff]
    %v1123 = vld [vmem:[%s1120 + $0x10] sm:$0xff]
    %v1124 = vld [vmem:[%s1120 + $0x18] sm:$0xff]
    %s1125 = scalar_lea.vmem %s4, 2
    %v1126 = vld [vmem:[%s1125] sm:$0x1]
    %v1128 = vperm.slane %v1126, 0
    %v1131 = vsel %vm128, %v1118, 0
    %v1134 = vsel %vm128, %v1119, 0
    %1136 = vmatpush.msra.mxu0 0.0
    %1137 = vmatpush.msra.mxu0 0.0
    %1138 = vmatpush.msra.mxu0 0.0
    %1139 = vmatpush.msra.mxu0 0.0
    %1140 = vmatpush.msra.mxu0 0.0
    %1141 = vmatpush.msra.mxu0 0.0
    %1142 = vmatpush.msra.mxu0 0.0
    %1143 = vmatpush.msra.mxu0 0.0
    %1144 = vmatpush.msra.mxu0 0.0
    %1145 = vmatpush.msra.mxu0 0.0
    %1146 = vmatpush.msra.mxu0 0.0
    %1147 = vmatpush.msra.mxu0 0.0
    %1148 = vmatpush.msra.mxu0 %v1124
    %1149 = vmatpush.msra.mxu0 %v1123
    %1150 = vmatpush.msra.mxu0 %v1122
    %1151 = vmatpush.msra.mxu0 %v1121
    %1152 = vmatmul.f32.gmra.mxu0 %v1131
    %v1153 = vpop.f32.mrf.mxu0
    %v1154 = vadd.f32 %v1128, %v1153
    %1155 = vmatmul.f32.gmra.mxu0 %v1134
    %v1156 = vpop.f32.mrf.mxu0
    %v1157 = vadd.f32 %v1128, %v1156
    %1158 = vdwg.mxu0
    %s1159 = scalar_lea.vmem %s5, 64
    %v1160 = vld [vmem:[%s1159] sm:$0xff]
    %v1161 = vld [vmem:[%s1159 + $0x8] sm:$0xff]
    %v1162 = vld [vmem:[%s1159 + $0x10] sm:$0xff]
    %v1163 = vld [vmem:[%s1159 + $0x18] sm:$0xff]
    %v1165 = vsel %vm128, %v1154, 0
    %v1168 = vsel %vm128, %v1157, 0
    %1170 = vmatpush.msra.mxu0 0.0
    %1171 = vmatpush.msra.mxu0 0.0
    %1172 = vmatpush.msra.mxu0 0.0
    %1173 = vmatpush.msra.mxu0 0.0
    %1174 = vmatpush.msra.mxu0 0.0
    %1175 = vmatpush.msra.mxu0 0.0
    %1176 = vmatpush.msra.mxu0 0.0
    %1177 = vmatpush.msra.mxu0 0.0
    %1178 = vmatpush.msra.mxu0 0.0
    %1179 = vmatpush.msra.mxu0 0.0
    %1180 = vmatpush.msra.mxu0 0.0
    %1181 = vmatpush.msra.mxu0 0.0
    %1182 = vmatpush.msra.mxu0 %v1163
    %1183 = vmatpush.msra.mxu0 %v1162
    %1184 = vmatpush.msra.mxu0 %v1161
    %1185 = vmatpush.msra.mxu0 %v1160
    %1186 = vmatmul.f32.gmra.mxu0 %v1165
    %v1187 = vpop.f32.mrf.mxu0
    %v1188 = vadd.f32 0.0, %v1187
    %1189 = vmatmul.f32.gmra.mxu0 %v1168
    %v1190 = vpop.f32.mrf.mxu0
    %v1191 = vadd.f32 0.0, %v1190
    %1192 = vdwg.mxu0
    %1193 = vxpose.xlu0.b32.start [1/16] %v1188, 128
    %1194 = vxpose.xlu0.b32.cont [2/16] %v1191, 128
    %1195 = vxpose.xlu0.b32.cont [3/16] 0.0, 128
    %1196 = vxpose.xlu0.b32.cont [4/16] 0.0, 128
    %1197 = vxpose.xlu0.b32.cont [5/16] 0.0, 128
    %1198 = vxpose.xlu0.b32.cont [6/16] 0.0, 128
    %1199 = vxpose.xlu0.b32.cont [7/16] 0.0, 128
    %1200 = vxpose.xlu0.b32.cont [8/16] 0.0, 128
    %1201 = vxpose.xlu0.b32.cont [9/16] 0.0, 128
    %1202 = vxpose.xlu0.b32.cont [10/16] 0.0, 128
    %1203 = vxpose.xlu0.b32.cont [11/16] 0.0, 128
    %1204 = vxpose.xlu0.b32.cont [12/16] 0.0, 128
    %1205 = vxpose.xlu0.b32.cont [13/16] 0.0, 128
    %1206 = vxpose.xlu0.b32.cont [14/16] 0.0, 128
    %1207 = vxpose.xlu0.b32.cont [15/16] 0.0, 128
    %1208 = vxpose.xlu0.b32.end [16/16] 0.0, 128
    %v1209 = vpop.trf.xlu0
    %v1210 = vpop.trf.xlu0
    %v1211 = vpop.trf.xlu0
    %v1212 = vpop.trf.xlu0
    %v1213 = vpop.trf.xlu0
    %v1214 = vpop.trf.xlu0
    %v1215 = vpop.trf.xlu0
    %v1216 = vpop.trf.xlu0
    %v1217 = vpop.trf.xlu0
    %v1218 = vpop.trf.xlu0
    %v1219 = vpop.trf.xlu0
    %v1220 = vpop.trf.xlu0
    %v1221 = vpop.trf.xlu0
    %v1222 = vpop.trf.xlu0
    %v1223 = vpop.trf.xlu0
    %v1224 = vpop.trf.xlu0
    %v1225 = vpack.c.bf16 %v1154, %v1154
    %v1226 = vpack.c.bf16 %v1157, %v1157
    %s1227 = scalar_lea.vmem %s6, 2
    %v1228 = vld [vmem:[%s1227] sm:$0x1]
    %1230 = vset.pattern.permute.xlu0 4
    %1231 = vperm.xlu0 %1230, %v1188
    %v1232 = vpop.permute.xlu0 %1231
    %1235 = vset.pattern.permute.xlu0 4
    %1236 = vperm.xlu0 %1235, %v1191
    %v1237 = vpop.permute.xlu0 %1236
    %v1239 = vperm.slane %v1209, 0
    %v1240 = vadd.f32 %v1232, %v1239
    %v1241 = vadd.f32 %v1237, %v1239
    %vm1242 = vcmp.gt.f32.partialorder %v1240, 0.0
    %vm1243 = vcmp.gt.f32.partialorder %v1241, 0.0
    %v1244 = vmul.f32 %v1240, 0.2
    %v1245 = vmul.f32 %v1241, 0.2
    %v1246 = vsel %vm1242, %v1240, %v1244
    %v1247 = vsel %vm1243, %v1241, %v1245
    %v1248 = vadd.f32 %v1246, %v126
    %v1249 = vadd.f32 %v1247, %v127
    %v1250 = vsel %vm292, %v1248, -inf
    %1251 = vmax.xlane.f32.xlu0 %v1250
    %v1252 = vpop.xlane.xlu0 %1251
    %v1253 = vsel %vm292, %v1249, -inf
    %1254 = vmax.xlane.f32.xlu0 %v1253
    %v1255 = vpop.xlane.xlu0 %1254
    %v1256 = vsub.f32 %v1248, %v1252
    %v1257 = vsub.f32 %v1249, %v1255
    %v1258 = vmul.f32 %v1256, 1.442695
    %v1259 = vpow.pop %v1258
    %v1260 = vmul.f32 %v1257, 1.442695
    %v1261 = vpow.pop %v1260
    %v1262 = vsel %vm292, %v1259, 0.0
    %1263 = vadd.xlane.f32.xlu0 %v1262
    %v1264 = vpop.xlane.xlu0 %1263
    %v1265 = vsel %vm292, %v1261, 0.0
    %1266 = vadd.xlane.f32.xlu0 %v1265
    %v1267 = vpop.xlane.xlu0 %1266
    %v1268 = vpack.c.bf16 %v1261, %v1259
    %v1271 = vunpack.c.l.b16 %v1225
    %v1272 = vunpack.c.l.b16 %v1226
    %v1273 = vpack.c.b16 %v1272, %v1271
    %v1276 = vsel %vm292, %v1268, 0
    %1278 = vmatpush.bf16.msra.mxu0 0
    %1279 = vmatpush.bf16.msra.mxu0 0
    %1280 = vmatpush.bf16.msra.mxu0 0
    %1281 = vmatpush.bf16.msra.mxu0 0
    %1282 = vmatpush.bf16.msra.mxu0 0
    %1283 = vmatpush.bf16.msra.mxu0 0
    %1284 = vmatpush.bf16.msra.mxu0 0
    %1285 = vmatpush.bf16.msra.mxu0 %v1273
    %1286 = vmatmul.bf16.gmra.mxu0 %v1276
    %v1287 = vpop.f32.mrf.mxu0
    %v1288 = vadd.f32 0.0, %v1287
    %v1289 = vpop.f32.mrf.mxu0
    %v1290 = vadd.f32 0.0, %v1289
    %1291 = vdwg.mxu0
    %v1292 = vrcp.pop %v1264
    %v1293 = vrcp.pop %v1267
    %v1294 = vmul.f32 %v1288, %v1292
    %v1295 = vmul.f32 %v1290, %v1293
    %v1297 = vperm.slane %v1228, 0
    %v1299 = vadd.f32 %v1294, %v1297
    %v1300 = vadd.f32 %v1295, %v1297
    %vm1301 = vcmp.gt.f32.partialorder %v1299, 0.0
    %vm1302 = vcmp.gt.f32.partialorder %v1300, 0.0
    %v1303 = vmul.f32 %v1299, 0.01
    %v1304 = vmul.f32 %v1300, 0.01
    %v1305 = vsel %vm1301, %v1299, %v1303
    %v1306 = vsel %vm1302, %v1300, %v1304
    %1307 = vst.msk [vmem:[#allocation2] sm:$0xff] %vm39, %v1305
    %1308 = vst.msk [vmem:[#allocation2 + $0x8] sm:$0xff] %vm39, %v1306
    %1309 = vset.pattern.permute.xlu0 5
    %1310 = vperm.xlu0 %1309, %v1188
    %v1311 = vpop.permute.xlu0 %1310
    %1313 = vset.pattern.permute.xlu0 5
    %1314 = vperm.xlu0 %1313, %v1191
    %v1315 = vpop.permute.xlu0 %1314
    %v1317 = vperm.slane %v1209, 1
    %v1318 = vadd.f32 %v1311, %v1317
    %v1319 = vadd.f32 %v1315, %v1317
    %vm1320 = vcmp.gt.f32.partialorder %v1318, 0.0
    %vm1321 = vcmp.gt.f32.partialorder %v1319, 0.0
    %v1322 = vmul.f32 %v1318, 0.2
    %v1323 = vmul.f32 %v1319, 0.2
    %v1324 = vsel %vm1320, %v1318, %v1322
    %v1325 = vsel %vm1321, %v1319, %v1323
    %v1326 = vadd.f32 %v1324, %v126
    %v1327 = vadd.f32 %v1325, %v127
    %v1328 = vsel %vm292, %v1326, -inf
    %1329 = vmax.xlane.f32.xlu0 %v1328
    %v1330 = vpop.xlane.xlu0 %1329
    %v1331 = vsel %vm292, %v1327, -inf
    %1332 = vmax.xlane.f32.xlu0 %v1331
    %v1333 = vpop.xlane.xlu0 %1332
    %v1334 = vsub.f32 %v1326, %v1330
    %v1335 = vsub.f32 %v1327, %v1333
    %v1336 = vmul.f32 %v1334, 1.442695
    %v1337 = vpow.pop %v1336
    %v1338 = vmul.f32 %v1335, 1.442695
    %v1339 = vpow.pop %v1338
    %v1340 = vsel %vm292, %v1337, 0.0
    %1341 = vadd.xlane.f32.xlu0 %v1340
    %v1342 = vpop.xlane.xlu0 %1341
    %v1343 = vsel %vm292, %v1339, 0.0
    %1344 = vadd.xlane.f32.xlu0 %v1343
    %v1345 = vpop.xlane.xlu0 %1344
    %v1346 = vpack.c.bf16 %v1339, %v1337
    %1347 = vrot.lane.b32.xlu0 %v1273, 120
    %v1348 = vpop.permute.xlu0 %1347
    %v1351 = vsel %vm292, %v1346, 0
    %1353 = vmatpush.bf16.msra.mxu0 0
    %1354 = vmatpush.bf16.msra.mxu0 0
    %1355 = vmatpush.bf16.msra.mxu0 0
    %1356 = vmatpush.bf16.msra.mxu0 0
    %1357 = vmatpush.bf16.msra.mxu0 0
    %1358 = vmatpush.bf16.msra.mxu0 0
    %1359 = vmatpush.bf16.msra.mxu0 0
    %1360 = vmatpush.bf16.msra.mxu0 %v1348
    %1361 = vmatmul.bf16.gmra.mxu0 %v1351
    %v1362 = vpop.f32.mrf.mxu0
    %v1363 = vadd.f32 0.0, %v1362
    %v1364 = vpop.f32.mrf.mxu0
    %v1365 = vadd.f32 0.0, %v1364
    %1366 = vdwg.mxu0
    %v1367 = vrcp.pop %v1342
    %v1368 = vrcp.pop %v1345
    %v1369 = vmul.f32 %v1363, %v1367
    %v1370 = vmul.f32 %v1365, %v1368
    %1371 = vrot.lane.b32.xlu0 %v1297, 120
    %v1372 = vpop.permute.xlu0 %1371
    %v1374 = vadd.f32 %v1369, %v1372
    %v1375 = vadd.f32 %v1370, %v1372
    %vm1376 = vcmp.gt.f32.partialorder %v1374, 0.0
    %vm1377 = vcmp.gt.f32.partialorder %v1375, 0.0
    %v1378 = vmul.f32 %v1374, 0.01
    %v1379 = vmul.f32 %v1375, 0.01
    %v1380 = vsel %vm1376, %v1374, %v1378
    %v1381 = vsel %vm1377, %v1375, %v1379
    %1384 = vrot.lane.b32.xlu0 %v1380, 8
    %v1385 = vpop.permute.xlu0 %1384
    %1386 = vrot.lane.b32.xlu0 %v1381, 8
    %v1387 = vpop.permute.xlu0 %1386
    %1390 = vst.msk [vmem:[#allocation2] sm:$0xff] %vm433, %v1385
    %1391 = vst.msk [vmem:[#allocation2 + $0x8] sm:$0xff] %vm433, %v1387
    %1392 = vset.pattern.permute.xlu0 6
    %1393 = vperm.xlu0 %1392, %v1188
    %v1394 = vpop.permute.xlu0 %1393
    %1396 = vset.pattern.permute.xlu0 6
    %1397 = vperm.xlu0 %1396, %v1191
    %v1398 = vpop.permute.xlu0 %1397
    %v1400 = vperm.slane %v1209, 2
    %v1401 = vadd.f32 %v1394, %v1400
    %v1402 = vadd.f32 %v1398, %v1400
    %vm1403 = vcmp.gt.f32.partialorder %v1401, 0.0
    %vm1404 = vcmp.gt.f32.partialorder %v1402, 0.0
    %v1405 = vmul.f32 %v1401, 0.2
    %v1406 = vmul.f32 %v1402, 0.2
    %v1407 = vsel %vm1403, %v1401, %v1405
    %v1408 = vsel %vm1404, %v1402, %v1406
    %v1409 = vadd.f32 %v1407, %v126
    %v1410 = vadd.f32 %v1408, %v127
    %v1411 = vsel %vm292, %v1409, -inf
    %1412 = vmax.xlane.f32.xlu0 %v1411
    %v1413 = vpop.xlane.xlu0 %1412
    %v1414 = vsel %vm292, %v1410, -inf
    %1415 = vmax.xlane.f32.xlu0 %v1414
    %v1416 = vpop.xlane.xlu0 %1415
    %v1417 = vsub.f32 %v1409, %v1413
    %v1418 = vsub.f32 %v1410, %v1416
    %v1419 = vmul.f32 %v1417, 1.442695
    %v1420 = vpow.pop %v1419
    %v1421 = vmul.f32 %v1418, 1.442695
    %v1422 = vpow.pop %v1421
    %v1423 = vsel %vm292, %v1420, 0.0
    %1424 = vadd.xlane.f32.xlu0 %v1423
    %v1425 = vpop.xlane.xlu0 %1424
    %v1426 = vsel %vm292, %v1422, 0.0
    %1427 = vadd.xlane.f32.xlu0 %v1426
    %v1428 = vpop.xlane.xlu0 %1427
    %v1429 = vpack.c.bf16 %v1422, %v1420
    %1430 = vrot.lane.b32.xlu0 %v1273, 112
    %v1431 = vpop.permute.xlu0 %1430
    %v1434 = vsel %vm292, %v1429, 0
    %1436 = vmatpush.bf16.msra.mxu0 0
    %1437 = vmatpush.bf16.msra.mxu0 0
    %1438 = vmatpush.bf16.msra.mxu0 0
    %1439 = vmatpush.bf16.msra.mxu0 0
    %1440 = vmatpush.bf16.msra.mxu0 0
    %1441 = vmatpush.bf16.msra.mxu0 0
    %1442 = vmatpush.bf16.msra.mxu0 0
    %1443 = vmatpush.bf16.msra.mxu0 %v1431
    %1444 = vmatmul.bf16.gmra.mxu0 %v1434
    %v1445 = vpop.f32.mrf.mxu0
    %v1446 = vadd.f32 0.0, %v1445
    %v1447 = vpop.f32.mrf.mxu0
    %v1448 = vadd.f32 0.0, %v1447
    %1449 = vdwg.mxu0
    %v1450 = vrcp.pop %v1425
    %v1451 = vrcp.pop %v1428
    %v1452 = vmul.f32 %v1446, %v1450
    %v1453 = vmul.f32 %v1448, %v1451
    %1454 = vrot.lane.b32.xlu0 %v1297, 112
    %v1455 = vpop.permute.xlu0 %1454
    %v1457 = vadd.f32 %v1452, %v1455
    %v1458 = vadd.f32 %v1453, %v1455
    %vm1459 = vcmp.gt.f32.partialorder %v1457, 0.0
    %vm1460 = vcmp.gt.f32.partialorder %v1458, 0.0
    %v1461 = vmul.f32 %v1457, 0.01
    %v1462 = vmul.f32 %v1458, 0.01
    %v1463 = vsel %vm1459, %v1457, %v1461
    %v1464 = vsel %vm1460, %v1458, %v1462
    %1467 = vrot.lane.b32.xlu0 %v1463, 16
    %v1468 = vpop.permute.xlu0 %1467
    %1469 = vrot.lane.b32.xlu0 %v1464, 16
    %v1470 = vpop.permute.xlu0 %1469
    %1473 = vst.msk [vmem:[#allocation2] sm:$0xff] %vm517, %v1468
    %1474 = vst.msk [vmem:[#allocation2 + $0x8] sm:$0xff] %vm517, %v1470
    %1475 = vset.pattern.permute.xlu0 7
    %1476 = vperm.xlu0 %1475, %v1188
    %v1477 = vpop.permute.xlu0 %1476
    %1479 = vset.pattern.permute.xlu0 7
    %1480 = vperm.xlu0 %1479, %v1191
    %v1481 = vpop.permute.xlu0 %1480
    %v1483 = vperm.slane %v1209, 3
    %v1484 = vadd.f32 %v1477, %v1483
    %v1485 = vadd.f32 %v1481, %v1483
    %vm1486 = vcmp.gt.f32.partialorder %v1484, 0.0
    %vm1487 = vcmp.gt.f32.partialorder %v1485, 0.0
    %v1488 = vmul.f32 %v1484, 0.2
    %v1489 = vmul.f32 %v1485, 0.2
    %v1490 = vsel %vm1486, %v1484, %v1488
    %v1491 = vsel %vm1487, %v1485, %v1489
    %v1492 = vadd.f32 %v1490, %v126
    %v1493 = vadd.f32 %v1491, %v127
    %v1494 = vsel %vm292, %v1492, -inf
    %1495 = vmax.xlane.f32.xlu0 %v1494
    %v1496 = vpop.xlane.xlu0 %1495
    %v1497 = vsel %vm292, %v1493, -inf
    %1498 = vmax.xlane.f32.xlu0 %v1497
    %v1499 = vpop.xlane.xlu0 %1498
    %v1500 = vsub.f32 %v1492, %v1496
    %v1501 = vsub.f32 %v1493, %v1499
    %v1502 = vmul.f32 %v1500, 1.442695
    %v1503 = vpow.pop %v1502
    %v1504 = vmul.f32 %v1501, 1.442695
    %v1505 = vpow.pop %v1504
    %v1506 = vsel %vm292, %v1503, 0.0
    %1507 = vadd.xlane.f32.xlu0 %v1506
    %v1508 = vpop.xlane.xlu0 %1507
    %v1509 = vsel %vm292, %v1505, 0.0
    %1510 = vadd.xlane.f32.xlu0 %v1509
    %v1511 = vpop.xlane.xlu0 %1510
    %v1512 = vpack.c.bf16 %v1505, %v1503
    %1513 = vrot.lane.b32.xlu0 %v1273, 104
    %v1514 = vpop.permute.xlu0 %1513
    %v1517 = vsel %vm292, %v1512, 0
    %1519 = vmatpush.bf16.msra.mxu0 0
    %1520 = vmatpush.bf16.msra.mxu0 0
    %1521 = vmatpush.bf16.msra.mxu0 0
    %1522 = vmatpush.bf16.msra.mxu0 0
    %1523 = vmatpush.bf16.msra.mxu0 0
    %1524 = vmatpush.bf16.msra.mxu0 0
    %1525 = vmatpush.bf16.msra.mxu0 0
    %1526 = vmatpush.bf16.msra.mxu0 %v1514
    %1527 = vmatmul.bf16.gmra.mxu0 %v1517
    %v1528 = vpop.f32.mrf.mxu0
    %v1529 = vadd.f32 0.0, %v1528
    %v1530 = vpop.f32.mrf.mxu0
    %v1531 = vadd.f32 0.0, %v1530
    %1532 = vdwg.mxu0
    %v1533 = vrcp.pop %v1508
    %v1534 = vrcp.pop %v1511
    %v1535 = vmul.f32 %v1529, %v1533
    %v1536 = vmul.f32 %v1531, %v1534
    %1537 = vrot.lane.b32.xlu0 %v1297, 104
    %v1538 = vpop.permute.xlu0 %1537
    %v1540 = vadd.f32 %v1535, %v1538
    %v1541 = vadd.f32 %v1536, %v1538
    %vm1542 = vcmp.gt.f32.partialorder %v1540, 0.0
    %vm1543 = vcmp.gt.f32.partialorder %v1541, 0.0
    %v1544 = vmul.f32 %v1540, 0.01
    %v1545 = vmul.f32 %v1541, 0.01
    %v1546 = vsel %vm1542, %v1540, %v1544
    %v1547 = vsel %vm1543, %v1541, %v1545
    %1550 = vrot.lane.b32.xlu0 %v1546, 24
    %v1551 = vpop.permute.xlu0 %1550
    %1552 = vrot.lane.b32.xlu0 %v1547, 24
    %v1553 = vpop.permute.xlu0 %1552
    %1556 = vst.msk [vmem:[#allocation2] sm:$0xff] %vm601, %v1551
    %1557 = vst.msk [vmem:[#allocation2 + $0x8] sm:$0xff] %vm601, %v1553
    %v1558 = vld [vmem:[#allocation2] sm:$0xff]
    %v1559 = vld [vmem:[#allocation2 + $0x8] sm:$0xff]
    %v1560 = vld [vmem:[%s8] sm:$0x1]
    %v1561 = vunpack.c.l.bf16 %v1560
    %v1563 = vsel %vm292, %v1561, 0
    %1565 = vmatpush.msra.mxu0 0.0
    %1566 = vmatpush.msra.mxu0 0.0
    %1567 = vmatpush.msra.mxu0 0.0
    %1568 = vmatpush.msra.mxu0 0.0
    %1569 = vmatpush.msra.mxu0 0.0
    %1570 = vmatpush.msra.mxu0 0.0
    %1571 = vmatpush.msra.mxu0 0.0
    %1572 = vmatpush.msra.mxu0 0.0
    %1573 = vmatpush.msra.mxu0 0.0
    %1574 = vmatpush.msra.mxu0 0.0
    %1575 = vmatpush.msra.mxu0 0.0
    %1576 = vmatpush.msra.mxu0 0.0
    %1577 = vmatpush.msra.mxu0 0.0
    %1578 = vmatpush.msra.mxu0 0.0
    %1579 = vmatpush.msra.mxu0 %v1559
    %1580 = vmatpush.msra.mxu0 %v1558
    %1581 = vmatmul.f32.gmra.mxu0 %v1563
    %v1582 = vpop.f32.mrf.mxu0
    %v1583 = vadd.f32 0.0, %v1582
    %1584 = vdwg.mxu0
    %vm1585 = vcmask 254976
    %1586 = vst.msk [vmem:[#allocation4] sm:$0x3] %vm1585, %v1583
    // Predicated region
    $region38: #{tpu_custom_call.1} parent=1 // pred_check
      _
    $region39: #{tpu_custom_call.1} parent=1 // pred_check_branch
      %1588 = sbr.rel (0) target = $region41
    $region40: #{tpu_custom_call.1} parent=1 // pred_region
      %1590 = vsyncadd [#allocation3], 0
      %s1591 = sshll.u32 [#allocation2], 4
      %s1592 = int_to_ptr.vmem [resolvable:$true] %s1591
      %s1593 = sshll.u32 %s9, 4
      %s1594 = int_to_ptr.hbm [resolvable:$true] %s1593
      %1599 = dma.vmem_to_hbm [thread:$0]  %s1592, 256, %s1594, [#allocation3], 128, 128, 8
    $region41: #{tpu_custom_call.1} parent=1 // pred_fallthru
      _
    // Predicated region
    $region42: #{tpu_custom_call.1} parent=1 // pred_check
      _
    $region43: #{tpu_custom_call.1} parent=1 // pred_check_branch
      %1601 = sbr.rel (0) target = $region45
    $region44: #{tpu_custom_call.1} parent=1 // pred_region
      %1603 = vsyncadd [#allocation5], 0
      %s1605 = sshll.u32 [#allocation4], 4
      %s1606 = int_to_ptr.vmem [resolvable:$true] %s1605
      %s1607 = sshll.u32 %s10, 4
      %s1608 = int_to_ptr.hbm [resolvable:$true] %s1607
      %1610 = dma.vmem_to_hbm [thread:$0]  %s1606, 32, %s1608, [#allocation5]
    $region45: #{tpu_custom_call.1} parent=1 // pred_fallthru
      _
    // Predicated region
    $region46: #{tpu_custom_call.1} parent=1 // pred_check
      _
    $region47: #{tpu_custom_call.1} parent=1 // pred_check_branch
      %1612 = sbr.rel (0) target = $region49
    $region48: #{tpu_custom_call.1} parent=1 // pred_region
      %1614 = dma.done [#allocation3], 256
    $region49: #{tpu_custom_call.1} parent=1 // pred_fallthru
      _
    // Predicated region
    $region50: #{tpu_custom_call.1} parent=1 // pred_check
      _
    $region51: #{tpu_custom_call.1} parent=1 // pred_check_branch
      %1616 = sbr.rel (0) target = $region53
    $region52: #{tpu_custom_call.1} parent=1 // pred_region
      %1618 = dma.done [#allocation5], 32
    $region53: #{tpu_custom_call.1} parent=1 // pred_fallthru
      _
    %1619 = vsyncpa [#allocation3], 1
    %1620 = vsyncpa [#allocation5], 1

</llo_original>
